<compile_context>
chip_gen: v6e
topology: v6e:2x2x1
jax: 0.10.0
libtpu: 0.0.40
codegen_flags: <defaults>
</compile_context>

<pallas_src>
import functools

import jax
import jax.numpy as jnp
from jax import lax
from jax.experimental import pallas as pl
from jax.experimental.pallas import tpu as pltpu


def bottleneck_kernel(x_ref, w1_ref, w2_ref, w3_ref, b1_ref, b2_ref, b3_ref,
                      row_ref, col_ref, out_ref, *, H, W):
    HW = x_ref.shape[1]            # H * W (lane dimension)

    # ---- conv1 (1x1) + folded-BN bias + ReLU: one channel matmul on the MXU.
    xb = x_ref[...].astype(jnp.bfloat16)                                  # (Cin, HW)
    y1 = jnp.dot(w1_ref[...], xb, preferred_element_type=jnp.float32)    # (P, HW) f32
    y1 = jnp.maximum(y1 + b1_ref[...], 0.0)

    # ---- conv2 (3x3, stride 1, pad 1) + folded-BN bias + ReLU.
    # Build the im2col operand with lane rolls (XLU) + boundary masks, then do
    # a single deep-K (9*P) MXU contraction against the stacked tap weights.
    row = row_ref[...]             # (1, HW) int32: h index of each flat position
    col = col_ref[...]             # (1, HW) int32: w index of each flat position
    taps = []
    for dh in (-1, 0, 1):
        for dw in (-1, 0, 1):
            d = dh * W + dw
            # t[:, i] = y1[:, i + d]  (wrapped; wrap is masked off below)
            t = pltpu.roll(y1, (-d) % HW, 1) if d != 0 else y1
            conds = []
            if dh < 0:
                conds.append(row >= -dh)          # h + dh >= 0
            if dh > 0:
                conds.append(row < H - dh)        # h + dh < H
            if dw < 0:
                conds.append(col >= -dw)          # w + dw >= 0
            if dw > 0:
                conds.append(col < W - dw)        # w + dw < W
            if conds:
                valid = conds[0]
                for c in conds[1:]:
                    valid = jnp.logical_and(valid, c)
                t = jnp.where(valid, t, 0.0)      # zero padding at the border
            taps.append(t.astype(jnp.bfloat16))
    cols = jnp.concatenate(taps, axis=0)                                  # (9P, HW) bf16
    y2 = jnp.dot(w2_ref[...], cols, preferred_element_type=jnp.float32)  # (P, HW) f32
    y2 = jnp.maximum(y2 + b2_ref[...], 0.0)

    # ---- conv3 (1x1) + folded-BN bias.
    y3 = jnp.dot(w3_ref[...], y2.astype(jnp.bfloat16),
                 preferred_element_type=jnp.float32)                      # (Cout, HW) f32
    y3 = y3 + b3_ref[...]

    # ---- residual add + ReLU (f32 elementwise), lane-dense unmasked store.
    out_ref[...] = jnp.maximum(y3 + x_ref[...], 0.0)


def bottleneck_pallas(x, w1, w2, w3, s1, b1, s2, b2, s3, b3):
    """x: (N, Cin, H, W) f32.  w1:(Cin,P)  w2:(3,3,P,P) HWIO  w3:(P,4P).
    s*/b*: eval-mode BatchNorm folded scale/bias, shape (C,)."""
    N, Cin, H, W = x.shape
    P = w1.shape[1]
    Cout = w3.shape[1]
    assert Cout == Cin, "stride=1 / downsample=None requires inplanes == planes*4"
    HW = H * W

    # Fold BN scale into conv weights (host side); the kernel only adds bias.
    # Transposed "channel-matmul" forms, cast to bf16 for the MXU.
    w1t = jnp.transpose(w1 * s1).astype(jnp.bfloat16)                     # (P, Cin)
    w2t = jnp.transpose(w2 * s2, (3, 0, 1, 2)).reshape(P, 9 * P)          # (P, 9P)
    w2t = w2t.astype(jnp.bfloat16)
    w3t = jnp.transpose(w3 * s3).astype(jnp.bfloat16)                     # (Cout, P)
    b1c = b1.reshape(P, 1).astype(jnp.float32)
    b2c = b2.reshape(P, 1).astype(jnp.float32)
    b3c = b3.reshape(Cout, 1).astype(jnp.float32)

    # Flattened-spatial row/col indices (avoids in-kernel vector div/mod).
    rows = (jnp.arange(HW, dtype=jnp.int32) // W).reshape(1, HW)
    colsi = (jnp.arange(HW, dtype=jnp.int32) % W).reshape(1, HW)

    x2 = x.reshape(N, Cin, HW)

    flops = 2 * N * HW * (Cin * P + 9 * P * P + P * Cout)
    bytes_accessed = (x2.size + N * Cout * HW) * 4 \
        + (w1t.size + w2t.size + w3t.size) * 2 + (2 * P + Cout + 2 * HW) * 4

    out = pl.pallas_call(
        functools.partial(bottleneck_kernel, H=H, W=W),
        out_shape=jax.ShapeDtypeStruct((N, Cout, HW), jnp.float32),
        grid_spec=pltpu.PrefetchScalarGridSpec(
            num_scalar_prefetch=0,
            grid=(N,),
            in_specs=[
                pl.BlockSpec((None, Cin, HW), lambda n: (n, 0, 0)),   # x (one image)
                pl.BlockSpec((P, Cin),        lambda n: (0, 0)),      # w1 (folded, T)
                pl.BlockSpec((P, 9 * P),      lambda n: (0, 0)),      # w2 (stacked taps)
                pl.BlockSpec((Cout, P),       lambda n: (0, 0)),      # w3 (folded, T)
                pl.BlockSpec((P, 1),          lambda n: (0, 0)),      # b1
                pl.BlockSpec((P, 1),          lambda n: (0, 0)),      # b2
                pl.BlockSpec((Cout, 1),       lambda n: (0, 0)),      # b3
                pl.BlockSpec((1, HW),         lambda n: (0, 0)),      # row ids
                pl.BlockSpec((1, HW),         lambda n: (0, 0)),      # col ids
            ],
            out_specs=pl.BlockSpec((None, Cout, HW), lambda n: (n, 0, 0)),
        ),
        compiler_params=pltpu.CompilerParams(
            dimension_semantics=("parallel",),
            vmem_limit_bytes=32 * 1024 * 1024,   # raise for production spatial tiles
        ),
        cost_estimate=pl.CostEstimate(
            flops=flops, transcendentals=0, bytes_accessed=bytes_accessed),
    )(x2, w1t, w2t, w3t, b1c, b2c, b3c, rows, colsi)
    return out.reshape(N, Cout, H, W)


def bottleneck_ref(x, w1, w2, w3, s1, b1, s2, b2, s3, b3):
    """Pure-JAX reference (NCHW activations, HWIO weights) mirroring the
    kernel's folded BN and bf16 matmul operands with f32 accumulation."""
    dn = ("NCHW", "HWIO", "NCHW")
    bf16, f32 = jnp.bfloat16, jnp.float32
    w1f = (w1 * s1).astype(bf16).reshape(1, 1, *w1.shape)
    w2f = (w2 * s2).astype(bf16)
    w3f = (w3 * s3).astype(bf16).reshape(1, 1, *w3.shape)

    y = lax.conv_general_dilated(x.astype(bf16), w1f, (1, 1), "SAME",
                                 dimension_numbers=dn, preferred_element_type=f32)
    y = jnp.maximum(y + b1.reshape(1, -1, 1, 1), 0.0)
    y = lax.conv_general_dilated(y.astype(bf16), w2f, (1, 1), "SAME",
                                 dimension_numbers=dn, preferred_element_type=f32)
    y = jnp.maximum(y + b2.reshape(1, -1, 1, 1), 0.0)
    y = lax.conv_general_dilated(y.astype(bf16), w3f, (1, 1), "SAME",
                                 dimension_numbers=dn, preferred_element_type=f32)
    y = y + b3.reshape(1, -1, 1, 1)
    return jnp.maximum(y + x, 0.0)


if __name__ == "__main__":
    # Small but lane-realistic shapes: batch=2, planes=32 (expansion 4 ->
    # inplanes = out = 128 channels), spatial 16x16  ->  H*W = 256 lanes.
    N, H, W = 2, 16, 16
    planes = 32
    inplanes = planes * 4

    key = jax.random.PRNGKey(0)
    ks = jax.random.split(key, 5)
    x = jax.random.normal(ks[0], (N, inplanes, H, W), jnp.float32)

    # Conv weights (PyTorch shapes reordered to channel-matmul / HWIO form).
    w1 = jax.random.normal(ks[1], (inplanes, planes), jnp.float32) * 0.1
    w2 = jax.random.normal(ks[2], (3, 3, planes, planes), jnp.float32) * 0.1
    w3 = jax.random.normal(ks[3], (planes, planes * 4), jnp.float32) * 0.1

    # BatchNorm params (eval mode), folded into per-channel scale/bias.
    eps = 1e-5

    def fold_bn(k, c):
        kg, kb, km, kv = jax.random.split(k, 4)
        gamma = 1.0 + 0.1 * jax.random.normal(kg, (c,), jnp.float32)
        beta = 0.1 * jax.random.normal(kb, (c,), jnp.float32)
        mean = 0.1 * jax.random.normal(km, (c,), jnp.float32)
        var = jnp.abs(jax.random.normal(kv, (c,), jnp.float32)) + 0.5
        scale = gamma / jnp.sqrt(var + eps)
        bias = beta - mean * scale
        return scale, bias

    kbn = jax.random.split(ks[4], 3)
    s1, b1 = fold_bn(kbn[0], planes)
    s2, b2 = fold_bn(kbn[1], planes)
    s3, b3 = fold_bn(kbn[2], planes * 4)

    out = bottleneck_pallas(x, w1, w2, w3, s1, b1, s2, b2, s3, b3)
    out = jax.block_until_ready(out)

    ref = bottleneck_ref(x, w1, w2, w3, s1, b1, s2, b2, s3, b3)
    assert out.shape == (N, planes * 4, H, W)
    err = jnp.max(jnp.abs(out - ref))
    assert jnp.allclose(out, ref, rtol=2e-2, atol=2e-2), f"max abs err {err}"

    print("KERNEL_OK")
</pallas_src>

<mosaic_0001>
module attributes {stable_mosaic.version = 11 : i64} {
  func.func @bottleneck_kernel(%arg0: i32, %arg1: memref<1x128x256xf32, #tpu.memory_space<vmem>>, %arg2: memref<32x128xbf16, #tpu.memory_space<vmem>>, %arg3: memref<32x288xbf16, #tpu.memory_space<vmem>>, %arg4: memref<128x32xbf16, #tpu.memory_space<vmem>>, %arg5: memref<32x1xf32, #tpu.memory_space<vmem>>, %arg6: memref<32x1xf32, #tpu.memory_space<vmem>>, %arg7: memref<128x1xf32, #tpu.memory_space<vmem>>, %arg8: memref<1x256xi32, #tpu.memory_space<vmem>>, %arg9: memref<1x256xi32, #tpu.memory_space<vmem>>, %arg10: memref<1x128x256xf32, #tpu.memory_space<vmem>>) attributes {dimension_semantics = [#tpu.dimension_semantics<parallel>], iteration_bounds = array<i64: 2>, scalar_prefetch = 0 : i64, scratch_operands = 0 : i64, tpu.core_type = #tpu.core_type<tc>, window_params = [{transform_indices = @transform_0, window_bounds = array<i64: 1, 128, 256>}, {pipeline_mode = #tpu.pipeline_mode<synchronous>, transform_indices = @transform_1, window_bounds = array<i64: 32, 128>}, {pipeline_mode = #tpu.pipeline_mode<synchronous>, transform_indices = @transform_2, window_bounds = array<i64: 32, 288>}, {pipeline_mode = #tpu.pipeline_mode<synchronous>, transform_indices = @transform_3, window_bounds = array<i64: 128, 32>}, {pipeline_mode = #tpu.pipeline_mode<synchronous>, transform_indices = @transform_4, window_bounds = array<i64: 32, 1>}, {pipeline_mode = #tpu.pipeline_mode<synchronous>, transform_indices = @transform_5, window_bounds = array<i64: 32, 1>}, {pipeline_mode = #tpu.pipeline_mode<synchronous>, transform_indices = @transform_6, window_bounds = array<i64: 128, 1>}, {pipeline_mode = #tpu.pipeline_mode<synchronous>, transform_indices = @transform_7, window_bounds = array<i64: 1, 256>}, {pipeline_mode = #tpu.pipeline_mode<synchronous>, transform_indices = @transform_8, window_bounds = array<i64: 1, 256>}, {transform_indices = @transform_9, window_bounds = array<i64: 1, 128, 256>}]} {
    %c0 = arith.constant 0 : index
    %c0_0 = arith.constant 0 : index
    %c0_1 = arith.constant 0 : index
    %0 = vector.load %arg1[%c0, %c0_0, %c0_1] : memref<1x128x256xf32, #tpu.memory_space<vmem>>, vector<1x128x256xf32>
    %1 = vector.shape_cast %0 : vector<1x128x256xf32> to vector<128x256xf32>
    %2 = arith.truncf %1 : vector<128x256xf32> to vector<128x256xbf16>
    %c0_2 = arith.constant 0 : index
    %c0_3 = arith.constant 0 : index
    %3 = vector.load %arg2[%c0_2, %c0_3] : memref<32x128xbf16, #tpu.memory_space<vmem>>, vector<32x128xbf16>
    %cst = arith.constant dense<0.000000e+00> : vector<32x256xf32>
    %4 = tpu.matmul %3, %2, %cst {dimension_numbers = #tpu.dot_dimension_numbers<[1], [0], [0], [1], [0, 0, 1, 1], [], []>} : vector<32x128xbf16>, vector<128x256xbf16>, vector<32x256xf32> -> vector<32x256xf32>
    %c0_4 = arith.constant 0 : index
    %c0_5 = arith.constant 0 : index
    %5 = vector.load %arg5[%c0_4, %c0_5] : memref<32x1xf32, #tpu.memory_space<vmem>>, vector<32x1xf32>
    %6 = vector.broadcast %5 : vector<32x1xf32> to vector<32x256xf32>
    %7 = arith.addf %4, %6 : vector<32x256xf32>
    %cst_6 = arith.constant 0.000000e+00 : f32
    %8 = vector.broadcast %cst_6 : f32 to vector<32x256xf32>
    %9 = arith.maximumf %7, %8 : vector<32x256xf32>
    %c0_7 = arith.constant 0 : index
    %c0_8 = arith.constant 0 : index
    %10 = vector.load %arg8[%c0_7, %c0_8] : memref<1x256xi32, #tpu.memory_space<vmem>>, vector<1x256xi32>
    %c0_9 = arith.constant 0 : index
    %c0_10 = arith.constant 0 : index
    %11 = vector.load %arg9[%c0_9, %c0_10] : memref<1x256xi32, #tpu.memory_space<vmem>>, vector<1x256xi32>
    %c17_i32 = arith.constant 17 : i32
    %12 = tpu.dynamic_rotate %9 by %c17_i32 dim 1 : vector<32x256xf32>, i32 -> vector<32x256xf32>
    %c1_i32 = arith.constant 1 : i32
    %13 = vector.broadcast %c1_i32 : i32 to vector<1x256xi32>
    %14 = arith.cmpi sge, %10, %13 : vector<1x256xi32>
    %c1_i32_11 = arith.constant 1 : i32
    %15 = vector.broadcast %c1_i32_11 : i32 to vector<1x256xi32>
    %16 = arith.cmpi sge, %11, %15 : vector<1x256xi32>
    %17 = arith.andi %14, %16 : vector<1x256xi1>
    %cst_12 = arith.constant 0.000000e+00 : f32
    %18 = vector.shape_cast %17 : vector<1x256xi1> to vector<1x256xi1>
    %19 = vector.broadcast %18 : vector<1x256xi1> to vector<32x256xi1>
    %20 = vector.broadcast %cst_12 : f32 to vector<32x256xf32>
    %21 = arith.select %19, %12, %20 : vector<32x256xi1>, vector<32x256xf32>
    %22 = arith.truncf %21 : vector<32x256xf32> to vector<32x256xbf16>
    %c16_i32 = arith.constant 16 : i32
    %23 = tpu.dynamic_rotate %9 by %c16_i32 dim 1 : vector<32x256xf32>, i32 -> vector<32x256xf32>
    %c1_i32_13 = arith.constant 1 : i32
    %24 = vector.broadcast %c1_i32_13 : i32 to vector<1x256xi32>
    %25 = arith.cmpi sge, %10, %24 : vector<1x256xi32>
    %cst_14 = arith.constant 0.000000e+00 : f32
    %26 = vector.shape_cast %25 : vector<1x256xi1> to vector<1x256xi1>
    %27 = vector.broadcast %26 : vector<1x256xi1> to vector<32x256xi1>
    %28 = vector.broadcast %cst_14 : f32 to vector<32x256xf32>
    %29 = arith.select %27, %23, %28 : vector<32x256xi1>, vector<32x256xf32>
    %30 = arith.truncf %29 : vector<32x256xf32> to vector<32x256xbf16>
    %c15_i32 = arith.constant 15 : i32
    %31 = tpu.dynamic_rotate %9 by %c15_i32 dim 1 : vector<32x256xf32>, i32 -> vector<32x256xf32>
    %c1_i32_15 = arith.constant 1 : i32
    %32 = vector.broadcast %c1_i32_15 : i32 to vector<1x256xi32>
    %33 = arith.cmpi sge, %10, %32 : vector<1x256xi32>
    %c15_i32_16 = arith.constant 15 : i32
    %34 = vector.broadcast %c15_i32_16 : i32 to vector<1x256xi32>
    %35 = arith.cmpi slt, %11, %34 : vector<1x256xi32>
    %36 = arith.andi %33, %35 : vector<1x256xi1>
    %cst_17 = arith.constant 0.000000e+00 : f32
    %37 = vector.shape_cast %36 : vector<1x256xi1> to vector<1x256xi1>
    %38 = vector.broadcast %37 : vector<1x256xi1> to vector<32x256xi1>
    %39 = vector.broadcast %cst_17 : f32 to vector<32x256xf32>
    %40 = arith.select %38, %31, %39 : vector<32x256xi1>, vector<32x256xf32>
    %41 = arith.truncf %40 : vector<32x256xf32> to vector<32x256xbf16>
    %c1_i32_18 = arith.constant 1 : i32
    %42 = tpu.dynamic_rotate %9 by %c1_i32_18 dim 1 : vector<32x256xf32>, i32 -> vector<32x256xf32>
    %c1_i32_19 = arith.constant 1 : i32
    %43 = vector.broadcast %c1_i32_19 : i32 to vector<1x256xi32>
    %44 = arith.cmpi sge, %11, %43 : vector<1x256xi32>
    %cst_20 = arith.constant 0.000000e+00 : f32
    %45 = vector.shape_cast %44 : vector<1x256xi1> to vector<1x256xi1>
    %46 = vector.broadcast %45 : vector<1x256xi1> to vector<32x256xi1>
    %47 = vector.broadcast %cst_20 : f32 to vector<32x256xf32>
    %48 = arith.select %46, %42, %47 : vector<32x256xi1>, vector<32x256xf32>
    %49 = arith.truncf %48 : vector<32x256xf32> to vector<32x256xbf16>
    %50 = arith.truncf %9 : vector<32x256xf32> to vector<32x256xbf16>
    %c255_i32 = arith.constant 255 : i32
    %51 = tpu.dynamic_rotate %9 by %c255_i32 dim 1 : vector<32x256xf32>, i32 -> vector<32x256xf32>
    %c15_i32_21 = arith.constant 15 : i32
    %52 = vector.broadcast %c15_i32_21 : i32 to vector<1x256xi32>
    %53 = arith.cmpi slt, %11, %52 : vector<1x256xi32>
    %cst_22 = arith.constant 0.000000e+00 : f32
    %54 = vector.shape_cast %53 : vector<1x256xi1> to vector<1x256xi1>
    %55 = vector.broadcast %54 : vector<1x256xi1> to vector<32x256xi1>
    %56 = vector.broadcast %cst_22 : f32 to vector<32x256xf32>
    %57 = arith.select %55, %51, %56 : vector<32x256xi1>, vector<32x256xf32>
    %58 = arith.truncf %57 : vector<32x256xf32> to vector<32x256xbf16>
    %c241_i32 = arith.constant 241 : i32
    %59 = tpu.dynamic_rotate %9 by %c241_i32 dim 1 : vector<32x256xf32>, i32 -> vector<32x256xf32>
    %c15_i32_23 = arith.constant 15 : i32
    %60 = vector.broadcast %c15_i32_23 : i32 to vector<1x256xi32>
    %61 = arith.cmpi slt, %10, %60 : vector<1x256xi32>
    %c1_i32_24 = arith.constant 1 : i32
    %62 = vector.broadcast %c1_i32_24 : i32 to vector<1x256xi32>
    %63 = arith.cmpi sge, %11, %62 : vector<1x256xi32>
    %64 = arith.andi %61, %63 : vector<1x256xi1>
    %cst_25 = arith.constant 0.000000e+00 : f32
    %65 = vector.shape_cast %64 : vector<1x256xi1> to vector<1x256xi1>
    %66 = vector.broadcast %65 : vector<1x256xi1> to vector<32x256xi1>
    %67 = vector.broadcast %cst_25 : f32 to vector<32x256xf32>
    %68 = arith.select %66, %59, %67 : vector<32x256xi1>, vector<32x256xf32>
    %69 = arith.truncf %68 : vector<32x256xf32> to vector<32x256xbf16>
    %c240_i32 = arith.constant 240 : i32
    %70 = tpu.dynamic_rotate %9 by %c240_i32 dim 1 : vector<32x256xf32>, i32 -> vector<32x256xf32>
    %c15_i32_26 = arith.constant 15 : i32
    %71 = vector.broadcast %c15_i32_26 : i32 to vector<1x256xi32>
    %72 = arith.cmpi slt, %10, %71 : vector<1x256xi32>
    %cst_27 = arith.constant 0.000000e+00 : f32
    %73 = vector.shape_cast %72 : vector<1x256xi1> to vector<1x256xi1>
    %74 = vector.broadcast %73 : vector<1x256xi1> to vector<32x256xi1>
    %75 = vector.broadcast %cst_27 : f32 to vector<32x256xf32>
    %76 = arith.select %74, %70, %75 : vector<32x256xi1>, vector<32x256xf32>
    %77 = arith.truncf %76 : vector<32x256xf32> to vector<32x256xbf16>
    %c239_i32 = arith.constant 239 : i32
    %78 = tpu.dynamic_rotate %9 by %c239_i32 dim 1 : vector<32x256xf32>, i32 -> vector<32x256xf32>
    %c15_i32_28 = arith.constant 15 : i32
    %79 = vector.broadcast %c15_i32_28 : i32 to vector<1x256xi32>
    %80 = arith.cmpi slt, %10, %79 : vector<1x256xi32>
    %c15_i32_29 = arith.constant 15 : i32
    %81 = vector.broadcast %c15_i32_29 : i32 to vector<1x256xi32>
    %82 = arith.cmpi slt, %11, %81 : vector<1x256xi32>
    %83 = arith.andi %80, %82 : vector<1x256xi1>
    %cst_30 = arith.constant 0.000000e+00 : f32
    %84 = vector.shape_cast %83 : vector<1x256xi1> to vector<1x256xi1>
    %85 = vector.broadcast %84 : vector<1x256xi1> to vector<32x256xi1>
    %86 = vector.broadcast %cst_30 : f32 to vector<32x256xf32>
    %87 = arith.select %85, %78, %86 : vector<32x256xi1>, vector<32x256xf32>
    %88 = arith.truncf %87 : vector<32x256xf32> to vector<32x256xbf16>
    %89 = tpu.concatenate %22, %30, %41, %49, %50, %58, %69, %77, %88 in 0 : vector<32x256xbf16>, vector<32x256xbf16>, vector<32x256xbf16>, vector<32x256xbf16>, vector<32x256xbf16>, vector<32x256xbf16>, vector<32x256xbf16>, vector<32x256xbf16>, vector<32x256xbf16> -> vector<288x256xbf16>
    %c0_31 = arith.constant 0 : index
    %c0_32 = arith.constant 0 : index
    %90 = vector.load %arg3[%c0_31, %c0_32] : memref<32x288xbf16, #tpu.memory_space<vmem>>, vector<32x288xbf16>
    %cst_33 = arith.constant dense<0.000000e+00> : vector<32x256xf32>
    %91 = tpu.matmul %90, %89, %cst_33 {dimension_numbers = #tpu.dot_dimension_numbers<[1], [0], [0], [1], [0, 0, 1, 1], [], []>} : vector<32x288xbf16>, vector<288x256xbf16>, vector<32x256xf32> -> vector<32x256xf32>
    %c0_34 = arith.constant 0 : index
    %c0_35 = arith.constant 0 : index
    %92 = vector.load %arg6[%c0_34, %c0_35] : memref<32x1xf32, #tpu.memory_space<vmem>>, vector<32x1xf32>
    %93 = vector.broadcast %92 : vector<32x1xf32> to vector<32x256xf32>
    %94 = arith.addf %91, %93 : vector<32x256xf32>
    %cst_36 = arith.constant 0.000000e+00 : f32
    %95 = vector.broadcast %cst_36 : f32 to vector<32x256xf32>
    %96 = arith.maximumf %94, %95 : vector<32x256xf32>
    %c0_37 = arith.constant 0 : index
    %c0_38 = arith.constant 0 : index
    %97 = vector.load %arg4[%c0_37, %c0_38] : memref<128x32xbf16, #tpu.memory_space<vmem>>, vector<128x32xbf16>
    %98 = arith.truncf %96 : vector<32x256xf32> to vector<32x256xbf16>
    %cst_39 = arith.constant dense<0.000000e+00> : vector<128x256xf32>
    %99 = tpu.matmul %97, %98, %cst_39 {dimension_numbers = #tpu.dot_dimension_numbers<[1], [0], [0], [1], [0, 0, 1, 1], [], []>} : vector<128x32xbf16>, vector<32x256xbf16>, vector<128x256xf32> -> vector<128x256xf32>
    %c0_40 = arith.constant 0 : index
    %c0_41 = arith.constant 0 : index
    %100 = vector.load %arg7[%c0_40, %c0_41] : memref<128x1xf32, #tpu.memory_space<vmem>>, vector<128x1xf32>
    %101 = vector.broadcast %100 : vector<128x1xf32> to vector<128x256xf32>
    %102 = arith.addf %99, %101 : vector<128x256xf32>
    %c0_42 = arith.constant 0 : index
    %c0_43 = arith.constant 0 : index
    %c0_44 = arith.constant 0 : index
    %103 = vector.load %arg1[%c0_42, %c0_43, %c0_44] : memref<1x128x256xf32, #tpu.memory_space<vmem>>, vector<1x128x256xf32>
    %104 = vector.shape_cast %103 : vector<1x128x256xf32> to vector<128x256xf32>
    %105 = arith.addf %102, %104 : vector<128x256xf32>
    %cst_45 = arith.constant 0.000000e+00 : f32
    %106 = vector.broadcast %cst_45 : f32 to vector<128x256xf32>
    %107 = arith.maximumf %105, %106 : vector<128x256xf32>
    %c0_46 = arith.constant 0 : index
    %c0_47 = arith.constant 0 : index
    %c0_48 = arith.constant 0 : index
    %108 = vector.load %arg10[%c0_46, %c0_47, %c0_48] : memref<1x128x256xf32, #tpu.memory_space<vmem>>, vector<1x128x256xf32>
    %109 = vector.shape_cast %108 : vector<1x128x256xf32> to vector<128x256xf32>
    %110 = vector.shape_cast %107 : vector<128x256xf32> to vector<1x128x256xf32>
    tpu.vector_store %arg10[%c0_46, %c0_47, %c0_48], %110 {strides = array<i32>} : memref<1x128x256xf32, #tpu.memory_space<vmem>>, vector<1x128x256xf32>,
    return
  }
  func.func @transform_0(%arg0: i32) -> (i32, i32, i32) {
    %c0_i32 = arith.constant 0 : i32
    %c0_i32_0 = arith.constant 0 : i32
    %c0_i32_1 = arith.constant 0 : i32
    return %arg0, %c0_i32, %c0_i32_0 : i32, i32, i32
  }
  func.func @transform_1(%arg0: i32) -> (i32, i32) {
    %c0_i32 = arith.constant 0 : i32
    %c0_i32_0 = arith.constant 0 : i32
    %c0_i32_1 = arith.constant 0 : i32
    return %c0_i32, %c0_i32_0 : i32, i32
  }
  func.func @transform_2(%arg0: i32) -> (i32, i32) {
    %c0_i32 = arith.constant 0 : i32
    %c0_i32_0 = arith.constant 0 : i32
    %c0_i32_1 = arith.constant 0 : i32
    return %c0_i32, %c0_i32_0 : i32, i32
  }
  func.func @transform_3(%arg0: i32) -> (i32, i32) {
    %c0_i32 = arith.constant 0 : i32
    %c0_i32_0 = arith.constant 0 : i32
    %c0_i32_1 = arith.constant 0 : i32
    return %c0_i32, %c0_i32_0 : i32, i32
  }
  func.func @transform_4(%arg0: i32) -> (i32, i32) {
    %c0_i32 = arith.constant 0 : i32
    %c0_i32_0 = arith.constant 0 : i32
    %c0_i32_1 = arith.constant 0 : i32
    return %c0_i32, %c0_i32_0 : i32, i32
  }
  func.func @transform_5(%arg0: i32) -> (i32, i32) {
    %c0_i32 = arith.constant 0 : i32
    %c0_i32_0 = arith.constant 0 : i32
    %c0_i32_1 = arith.constant 0 : i32
    return %c0_i32, %c0_i32_0 : i32, i32
  }
  func.func @transform_6(%arg0: i32) -> (i32, i32) {
    %c0_i32 = arith.constant 0 : i32
    %c0_i32_0 = arith.constant 0 : i32
    %c0_i32_1 = arith.constant 0 : i32
    return %c0_i32, %c0_i32_0 : i32, i32
  }
  func.func @transform_7(%arg0: i32) -> (i32, i32) {
    %c0_i32 = arith.constant 0 : i32
    %c0_i32_0 = arith.constant 0 : i32
    %c0_i32_1 = arith.constant 0 : i32
    return %c0_i32, %c0_i32_0 : i32, i32
  }
  func.func @transform_8(%arg0: i32) -> (i32, i32) {
    %c0_i32 = arith.constant 0 : i32
    %c0_i32_0 = arith.constant 0 : i32
    %c0_i32_1 = arith.constant 0 : i32
    return %c0_i32, %c0_i32_0 : i32, i32
  }
  func.func @transform_9(%arg0: i32) -> (i32, i32, i32) {
    %c0_i32 = arith.constant 0 : i32
    %c0_i32_0 = arith.constant 0 : i32
    %c0_i32_1 = arith.constant 0 : i32
    return %arg0, %c0_i32, %c0_i32_0 : i32, i32, i32
  }
}

</mosaic_0001>

<llo_original>
// kernel: tpu_custom_call.1
$region0: #{tpu_custom_call.1}
  #allocation0 [shape = 'u32[]', space=smem, size = 0x4, offset = 0x4, fixed_abs, tag = 'smem constant byte address 0x4 - core index']
  #allocation1 [shape = 'u32[144,128]{1,0:T(1,128)}', space=vmem, size = 0x12000, scoped, tag = 'internal scratch']
  %s0 = inlined_call_operand.hbm [shape: f32[2,128,256], index: 0, kind: input, shape index: {}]
  %s1 = inlined_call_operand.vmem [shape: bf16[32,128], index: 1, kind: input, shape index: {}]
  %s2 = inlined_call_operand.vmem [shape: bf16[32,288], index: 2, kind: input, shape index: {}]
  %s3 = inlined_call_operand.vmem [shape: bf16[128,32], index: 3, kind: input, shape index: {}]
  %s4 = inlined_call_operand.vmem [shape: f32[32,1], index: 4, kind: input, shape index: {}]
  %s5 = inlined_call_operand.vmem [shape: f32[32,1], index: 5, kind: input, shape index: {}]
  %s6 = inlined_call_operand.vmem [shape: f32[128,1], index: 6, kind: input, shape index: {}]
  %s7 = inlined_call_operand.vmem [shape: s32[1,256], index: 7, kind: input, shape index: {}]
  %s8 = inlined_call_operand.vmem [shape: s32[1,256], index: 8, kind: input, shape index: {}]
  %s9 = inlined_call_operand.hbm [shape: f32[2,128,256], index: 9, kind: output, shape index: {}]
  %s10 = sld [smem:[#allocation0]]
  $region73: #{tpu_custom_call.1} parent=0
    _
  %s12 = ssub.s32 1, %s10
  %s13 = scalar_select 0, %s12, %s10
  $region1: #{tpu_custom_call.1} parent=0
    #allocation2 [shape = 'u8[262144]{0}', space=vmem, size = 0x40000, scoped, tag = 'input window, operand 0']
    #allocation3 [shape = 's32[2]{0}', space=sflag, size = 0x8, scoped, tag = 'scoped memory for tpu_custom_call.1']
    #allocation4 [shape = 's32[2]{0}', space=sflag, size = 0x8, scoped, tag = 'scoped memory for tpu_custom_call.1']
    #allocation5 [shape = 'u8[262144]{0}', space=vmem, size = 0x40000, scoped, tag = 'output window, operand 0']
    %14 = vsyncpa [#allocation3], 0
    %s15 = scalar_lea.sflag [#allocation3], 1
    %16 = vsyncpa %s15, 0
    %17 = vsyncpa [#allocation4], 0
    %s18 = scalar_lea.sflag [#allocation4], 1
    %19 = vsyncpa %s18, 0
    loop: start=0, step=1, limit=4
    $region2: #{tpu_custom_call.1} parent=1 // loop_pre_header
      _
    $region3: #{tpu_custom_call.1} parent=1 // loop_header
      %s21 = sphi 0, %s25
      %p22 = scmp.ge.s32.totalorder %s21, 4
      %s31 = sphi 0, %s33
      %s34 = sphi 0, %s31
      %s35 = sphi 0, %s34
      %s51 = sphi 0, %s35
      %s55 = sphi 0, %s55
      %s57 = sphi 0, %s55
      %s58 = sphi 0, %s57
      %s72 = sphi 0, %s58
      %s76 = sphi 0, %s76
      %s78 = sphi 0, %s76
      %s79 = sphi 0, %s78
      %s93 = sphi 0, %s79
      %s97 = sphi 0, %s97
      %s99 = sphi 0, %s97
      %s100 = sphi 0, %s99
      %s114 = sphi 0, %s100
      %s118 = sphi 0, %s118
      %s120 = sphi 0, %s118
      %s121 = sphi 0, %s120
      %s135 = sphi 0, %s121
      %s139 = sphi 0, %s139
      %s141 = sphi 0, %s139
      %s142 = sphi 0, %s141
      %s156 = sphi 0, %s142
      %s160 = sphi 0, %s160
      %s162 = sphi 0, %s160
      %s163 = sphi 0, %s162
      %s177 = sphi 0, %s163
      %s181 = sphi 0, %s181
      %s183 = sphi 0, %s181
      %s184 = sphi 0, %s183
      %s198 = sphi 0, %s184
      %s202 = sphi 0, %s202
      %s204 = sphi 0, %s202
      %s205 = sphi 0, %s204
      %s219 = sphi 0, %s205
      %s225 = sphi 0, %s227
      %s228 = sphi 0, %s225
      %s229 = sphi 0, %s228
      %s245 = sphi 0, %s229
    $region4: #{tpu_custom_call.1} parent=1 // loop_header_branch
      %24 = sbr.rel (%p22) target = $region8
    $region5: #{tpu_custom_call.1} parent=1 // loop_body
      %s26 = ssub.s32 %s21, 1
      %s27 = ssub.s32 %s21, 2
      %s28 = sadd.s32 %s21, 1
      %s29 = ssub.s32 %s21, %s28
      %p30 = scmp.eq.s32.totalorder %s29, 0
      %s32 = sadd.s32 %s31, 1
      %s33 = scalar_select %p30, %s31, %s32
      %p36 = pneg %p30
      %p37 = scmp.eq.s32.totalorder %s21, 1
      %p38 = por %p36, %p37
      %p39 = scmp.ne.s32.totalorder %s31, %s34
      %p40 = scmp.eq.s32.totalorder %s21, 0
      %p41 = por %p39, %p40
      %p42 = scmp.ne.s32.totalorder %s31, %s34
      %p43 = scmp.eq.s32.totalorder %s26, 1
      %p44 = por %p42, %p43
      %p45 = scmp.ne.s32.totalorder %s34, %s35
      %p46 = scmp.eq.s32.totalorder %s26, 0
      %p47 = por %p45, %p46
      %p48 = scmp.ne.s32.totalorder %s34, %s35
      %p49 = scmp.eq.s32.totalorder %s27, 1
      %p50 = por %p48, %p49
      %p52 = scmp.ne.s32.totalorder %s35, %s51
      %p53 = scmp.eq.s32.totalorder %s27, 0
      %p54 = por %p52, %p53
      %s56 = sadd.s32 %s55, 1
      %p59 = scmp.eq.s32.totalorder %s21, 1
      %p60 = scmp.ne.s32.totalorder %s55, %s57
      %p61 = scmp.eq.s32.totalorder %s21, 0
      %p62 = por %p60, %p61
      %p63 = scmp.ne.s32.totalorder %s55, %s57
      %p64 = scmp.eq.s32.totalorder %s26, 1
      %p65 = por %p63, %p64
      %p66 = scmp.ne.s32.totalorder %s57, %s58
      %p67 = scmp.eq.s32.totalorder %s26, 0
      %p68 = por %p66, %p67
      %p69 = scmp.ne.s32.totalorder %s57, %s58
      %p70 = scmp.eq.s32.totalorder %s27, 1
      %p71 = por %p69, %p70
      %p73 = scmp.ne.s32.totalorder %s58, %s72
      %p74 = scmp.eq.s32.totalorder %s27, 0
      %p75 = por %p73, %p74
      %s77 = sadd.s32 %s76, 1
      %p80 = scmp.eq.s32.totalorder %s21, 1
      %p81 = scmp.ne.s32.totalorder %s76, %s78
      %p82 = scmp.eq.s32.totalorder %s21, 0
      %p83 = por %p81, %p82
      %p84 = scmp.ne.s32.totalorder %s76, %s78
      %p85 = scmp.eq.s32.totalorder %s26, 1
      %p86 = por %p84, %p85
      %p87 = scmp.ne.s32.totalorder %s78, %s79
      %p88 = scmp.eq.s32.totalorder %s26, 0
      %p89 = por %p87, %p88
      %p90 = scmp.ne.s32.totalorder %s78, %s79
      %p91 = scmp.eq.s32.totalorder %s27, 1
      %p92 = por %p90, %p91
      %p94 = scmp.ne.s32.totalorder %s79, %s93
      %p95 = scmp.eq.s32.totalorder %s27, 0
      %p96 = por %p94, %p95
      %s98 = sadd.s32 %s97, 1
      %p101 = scmp.eq.s32.totalorder %s21, 1
      %p102 = scmp.ne.s32.totalorder %s97, %s99
      %p103 = scmp.eq.s32.totalorder %s21, 0
      %p104 = por %p102, %p103
      %p105 = scmp.ne.s32.totalorder %s97, %s99
      %p106 = scmp.eq.s32.totalorder %s26, 1
      %p107 = por %p105, %p106
      %p108 = scmp.ne.s32.totalorder %s99, %s100
      %p109 = scmp.eq.s32.totalorder %s26, 0
      %p110 = por %p108, %p109
      %p111 = scmp.ne.s32.totalorder %s99, %s100
      %p112 = scmp.eq.s32.totalorder %s27, 1
      %p113 = por %p111, %p112
      %p115 = scmp.ne.s32.totalorder %s100, %s114
      %p116 = scmp.eq.s32.totalorder %s27, 0
      %p117 = por %p115, %p116
      %s119 = sadd.s32 %s118, 1
      %p122 = scmp.eq.s32.totalorder %s21, 1
      %p123 = scmp.ne.s32.totalorder %s118, %s120
      %p124 = scmp.eq.s32.totalorder %s21, 0
      %p125 = por %p123, %p124
      %p126 = scmp.ne.s32.totalorder %s118, %s120
      %p127 = scmp.eq.s32.totalorder %s26, 1
      %p128 = por %p126, %p127
      %p129 = scmp.ne.s32.totalorder %s120, %s121
      %p130 = scmp.eq.s32.totalorder %s26, 0
      %p131 = por %p129, %p130
      %p132 = scmp.ne.s32.totalorder %s120, %s121
      %p133 = scmp.eq.s32.totalorder %s27, 1
      %p134 = por %p132, %p133
      %p136 = scmp.ne.s32.totalorder %s121, %s135
      %p137 = scmp.eq.s32.totalorder %s27, 0
      %p138 = por %p136, %p137
      %s140 = sadd.s32 %s139, 1
      %p143 = scmp.eq.s32.totalorder %s21, 1
      %p144 = scmp.ne.s32.totalorder %s139, %s141
      %p145 = scmp.eq.s32.totalorder %s21, 0
      %p146 = por %p144, %p145
      %p147 = scmp.ne.s32.totalorder %s139, %s141
      %p148 = scmp.eq.s32.totalorder %s26, 1
      %p149 = por %p147, %p148
      %p150 = scmp.ne.s32.totalorder %s141, %s142
      %p151 = scmp.eq.s32.totalorder %s26, 0
      %p152 = por %p150, %p151
      %p153 = scmp.ne.s32.totalorder %s141, %s142
      %p154 = scmp.eq.s32.totalorder %s27, 1
      %p155 = por %p153, %p154
      %p157 = scmp.ne.s32.totalorder %s142, %s156
      %p158 = scmp.eq.s32.totalorder %s27, 0
      %p159 = por %p157, %p158
      %s161 = sadd.s32 %s160, 1
      %p164 = scmp.eq.s32.totalorder %s21, 1
      %p165 = scmp.ne.s32.totalorder %s160, %s162
      %p166 = scmp.eq.s32.totalorder %s21, 0
      %p167 = por %p165, %p166
      %p168 = scmp.ne.s32.totalorder %s160, %s162
      %p169 = scmp.eq.s32.totalorder %s26, 1
      %p170 = por %p168, %p169
      %p171 = scmp.ne.s32.totalorder %s162, %s163
      %p172 = scmp.eq.s32.totalorder %s26, 0
      %p173 = por %p171, %p172
      %p174 = scmp.ne.s32.totalorder %s162, %s163
      %p175 = scmp.eq.s32.totalorder %s27, 1
      %p176 = por %p174, %p175
      %p178 = scmp.ne.s32.totalorder %s163, %s177
      %p179 = scmp.eq.s32.totalorder %s27, 0
      %p180 = por %p178, %p179
      %s182 = sadd.s32 %s181, 1
      %p185 = scmp.eq.s32.totalorder %s21, 1
      %p186 = scmp.ne.s32.totalorder %s181, %s183
      %p187 = scmp.eq.s32.totalorder %s21, 0
      %p188 = por %p186, %p187
      %p189 = scmp.ne.s32.totalorder %s181, %s183
      %p190 = scmp.eq.s32.totalorder %s26, 1
      %p191 = por %p189, %p190
      %p192 = scmp.ne.s32.totalorder %s183, %s184
      %p193 = scmp.eq.s32.totalorder %s26, 0
      %p194 = por %p192, %p193
      %p195 = scmp.ne.s32.totalorder %s183, %s184
      %p196 = scmp.eq.s32.totalorder %s27, 1
      %p197 = por %p195, %p196
      %p199 = scmp.ne.s32.totalorder %s184, %s198
      %p200 = scmp.eq.s32.totalorder %s27, 0
      %p201 = por %p199, %p200
      %s203 = sadd.s32 %s202, 1
      %p206 = scmp.eq.s32.totalorder %s21, 1
      %p207 = scmp.ne.s32.totalorder %s202, %s204
      %p208 = scmp.eq.s32.totalorder %s21, 0
      %p209 = por %p207, %p208
      %p210 = scmp.ne.s32.totalorder %s202, %s204
      %p211 = scmp.eq.s32.totalorder %s26, 1
      %p212 = por %p210, %p211
      %p213 = scmp.ne.s32.totalorder %s204, %s205
      %p214 = scmp.eq.s32.totalorder %s26, 0
      %p215 = por %p213, %p214
      %p216 = scmp.ne.s32.totalorder %s204, %s205
      %p217 = scmp.eq.s32.totalorder %s27, 1
      %p218 = por %p216, %p217
      %p220 = scmp.ne.s32.totalorder %s205, %s219
      %p221 = scmp.eq.s32.totalorder %s27, 0
      %p222 = por %p220, %p221
      %s223 = ssub.s32 %s21, %s28
      %p224 = scmp.eq.s32.totalorder %s223, 0
      %s226 = sadd.s32 %s225, 1
      %s227 = scalar_select %p224, %s225, %s226
      %p230 = pneg %p224
      %p231 = scmp.eq.s32.totalorder %s21, 1
      %p232 = por %p230, %p231
      %p233 = scmp.ne.s32.totalorder %s225, %s228
      %p234 = scmp.eq.s32.totalorder %s21, 0
      %p235 = por %p233, %p234
      %p236 = scmp.ne.s32.totalorder %s225, %s228
      %p237 = scmp.eq.s32.totalorder %s26, 1
      %p238 = por %p236, %p237
      %p239 = scmp.ne.s32.totalorder %s228, %s229
      %p240 = scmp.eq.s32.totalorder %s26, 0
      %p241 = por %p239, %p240
      %p242 = scmp.ne.s32.totalorder %s228, %s229
      %p243 = scmp.eq.s32.totalorder %s27, 1
      %p244 = por %p242, %p243
      %p246 = scmp.ne.s32.totalorder %s229, %s245
      %p247 = scmp.eq.s32.totalorder %s27, 0
      %p248 = por %p246, %p247
      %p249 = scmp.le.s32.totalorder 1, %s21
      %p250 = scmp.lt.s32.totalorder %s21, 3
      %p251 = pnand %p249, %p250
      %p252 = pneg %p251
      // Predicated region
      $region9: #{tpu_custom_call.1} parent=5 // pred_check
        _
      $region10: #{tpu_custom_call.1} parent=5 // pred_check_branch
        %254 = sbr.rel (%p251) target = $region12
      $region11: #{tpu_custom_call.1} parent=5 // pred_region
        %s255 = ssub.s32 %s21, 1
        // Predicated region
        $region13: #{tpu_custom_call.1} parent=11 // pred_check
          %p256 = pneg %p68
        $region14: #{tpu_custom_call.1} parent=11 // pred_check_branch
          %258 = sbr.rel (%p256) target = $region16
        $region15: #{tpu_custom_call.1} parent=11 // pred_region
          _
        $region16: #{tpu_custom_call.1} parent=11 // pred_fallthru
          _
        // Predicated region
        $region17: #{tpu_custom_call.1} parent=11 // pred_check
          %p259 = pneg %p89
        $region18: #{tpu_custom_call.1} parent=11 // pred_check_branch
          %261 = sbr.rel (%p259) target = $region20
        $region19: #{tpu_custom_call.1} parent=11 // pred_region
          _
        $region20: #{tpu_custom_call.1} parent=11 // pred_fallthru
          _
        // Predicated region
        $region21: #{tpu_custom_call.1} parent=11 // pred_check
          %p262 = pneg %p110
        $region22: #{tpu_custom_call.1} parent=11 // pred_check_branch
          %264 = sbr.rel (%p262) target = $region24
        $region23: #{tpu_custom_call.1} parent=11 // pred_region
          _
        $region24: #{tpu_custom_call.1} parent=11 // pred_fallthru
          _
        // Predicated region
        $region25: #{tpu_custom_call.1} parent=11 // pred_check
          %p265 = pneg %p131
        $region26: #{tpu_custom_call.1} parent=11 // pred_check_branch
          %267 = sbr.rel (%p265) target = $region28
        $region27: #{tpu_custom_call.1} parent=11 // pred_region
          _
        $region28: #{tpu_custom_call.1} parent=11 // pred_fallthru
          _
        // Predicated region
        $region29: #{tpu_custom_call.1} parent=11 // pred_check
          %p268 = pneg %p152
        $region30: #{tpu_custom_call.1} parent=11 // pred_check_branch
          %270 = sbr.rel (%p268) target = $region32
        $region31: #{tpu_custom_call.1} parent=11 // pred_region
          _
        $region32: #{tpu_custom_call.1} parent=11 // pred_fallthru
          _
        // Predicated region
        $region33: #{tpu_custom_call.1} parent=11 // pred_check
          %p271 = pneg %p173
        $region34: #{tpu_custom_call.1} parent=11 // pred_check_branch
          %273 = sbr.rel (%p271) target = $region36
        $region35: #{tpu_custom_call.1} parent=11 // pred_region
          _
        $region36: #{tpu_custom_call.1} parent=11 // pred_fallthru
          _
        // Predicated region
        $region37: #{tpu_custom_call.1} parent=11 // pred_check
          %p274 = pneg %p194
        $region38: #{tpu_custom_call.1} parent=11 // pred_check_branch
          %276 = sbr.rel (%p274) target = $region40
        $region39: #{tpu_custom_call.1} parent=11 // pred_region
          _
        $region40: #{tpu_custom_call.1} parent=11 // pred_fallthru
          _
        // Predicated region
        $region41: #{tpu_custom_call.1} parent=11 // pred_check
          %p277 = pneg %p215
        $region42: #{tpu_custom_call.1} parent=11 // pred_check_branch
          %279 = sbr.rel (%p277) target = $region44
        $region43: #{tpu_custom_call.1} parent=11 // pred_region
          _
        $region44: #{tpu_custom_call.1} parent=11 // pred_fallthru
          _
      $region12: #{tpu_custom_call.1} parent=5 // pred_fallthru
        _
      %p280 = scmp.lt.s32.totalorder %s21, 2
      // Predicated region
      $region45: #{tpu_custom_call.1} parent=5 // pred_check
        %p281 = pneg %p280
      $region46: #{tpu_custom_call.1} parent=5 // pred_check_branch
        %283 = sbr.rel (%p281) target = $region48
      $region47: #{tpu_custom_call.1} parent=5 // pred_region
        // Predicated region
        $region49: #{tpu_custom_call.1} parent=47 // pred_check
          %p284 = pneg %p41
        $region50: #{tpu_custom_call.1} parent=47 // pred_check_branch
          %286 = sbr.rel (%p284) target = $region52
        $region51: #{tpu_custom_call.1} parent=47 // pred_region
          %s287 = sand.u32 %s31, 1
          %s288 = scalar_lea.sflag [#allocation3], %s287
          %s289 = sand.u32 %s31, 1
          %s290 = smul.addr %s289, 256
          %s291 = scalar_lea.vmem [#allocation2], %s290
          %s293 = ssub.s32 4096, 4096
          %294 = vsyncadd %s288, %s293
          %s295 = smul.addr %s21, 32
          %s296 = smul.addr %s295, 128
          %s297 = scalar_lea.hbm %s0, %s296
          %s298 = sshll.u32 %s291, 4
          %s299 = int_to_ptr.vmem [resolvable:$true] %s298
          %304 = dma.hbm_to_vmem [thread:$0]  %s297, 4096, %s299, %s288, 256, 256, 16
        $region52: #{tpu_custom_call.1} parent=47 // pred_fallthru
          _
      $region48: #{tpu_custom_call.1} parent=5 // pred_fallthru
        _
      %p305 = scmp.le.s32.totalorder 1, %s21
      %p306 = scmp.lt.s32.totalorder %s21, 3
      %p307 = pnand %p305, %p306
      %p308 = pneg %p307
      // Predicated region
      $region53: #{tpu_custom_call.1} parent=5 // pred_check
        _
      $region54: #{tpu_custom_call.1} parent=5 // pred_check_branch
        %310 = sbr.rel (%p307) target = $region56
      $region55: #{tpu_custom_call.1} parent=5 // pred_region
        %s311 = ssub.s32 %s21, 1
        %s312 = sand.u32 %s34, 1
        %s313 = scalar_lea.sflag [#allocation3], %s312
        %s314 = sand.u32 %s34, 1
        %s315 = smul.addr %s314, 256
        %s316 = scalar_lea.vmem [#allocation2], %s315
        // Predicated region
        $region57: #{tpu_custom_call.1} parent=55 // pred_check
          %p317 = pneg %p47
        $region58: #{tpu_custom_call.1} parent=55 // pred_check_branch
          %319 = sbr.rel (%p317) target = $region60
        $region59: #{tpu_custom_call.1} parent=55 // pred_region
          %320 = dma.done %s313, 4096
        $region60: #{tpu_custom_call.1} parent=55 // pred_fallthru
          _
        %s321 = sand.u32 %s34, 1
        %s322 = scalar_lea.sflag [#allocation3], %s321
        %s323 = sand.u32 %s34, 1
        %s324 = smul.addr %s323, 256
        %s325 = scalar_lea.vmem [#allocation2], %s324
        %p326 = pneg %p47
        %p327 = pneg %p44
        %p328 = pneg %p68
        %p329 = pneg %p65
        %p330 = pneg %p89
        %p331 = pneg %p86
        %p332 = pneg %p110
        %p333 = pneg %p107
        %p334 = pneg %p131
        %p335 = pneg %p128
        %p336 = pneg %p152
        %p337 = pneg %p149
        %p338 = pneg %p173
        %p339 = pneg %p170
        %p340 = pneg %p194
        %p341 = pneg %p191
        %p342 = pneg %p215
        %p343 = pneg %p212
        %p344 = pneg %p241
        %p345 = pneg %p238
        %s346 = sand.u32 %s228, 1
        %s347 = scalar_lea.sflag [#allocation4], %s346
        %s348 = sand.u32 %s228, 1
        %s349 = smul.addr %s348, 256
        %s350 = scalar_lea.vmem [#allocation5], %s349
        %v352 = vld [vmem:[%s316] sm:$0xff]
        %v353 = vld [vmem:[%s316 + $0x8] sm:$0xff]
        %v354 = vld [vmem:[%s316 + $0x10] sm:$0xff]
        %v355 = vld [vmem:[%s316 + $0x18] sm:$0xff]
        %v356 = vld [vmem:[%s316 + $0x20] sm:$0xff]
        %v357 = vld [vmem:[%s316 + $0x28] sm:$0xff]
        %v358 = vld [vmem:[%s316 + $0x30] sm:$0xff]
        %v359 = vld [vmem:[%s316 + $0x38] sm:$0xff]
        %v360 = vld [vmem:[%s316 + $0x40] sm:$0xff]
        %v361 = vld [vmem:[%s316 + $0x48] sm:$0xff]
        %v362 = vld [vmem:[%s316 + $0x50] sm:$0xff]
        %v363 = vld [vmem:[%s316 + $0x58] sm:$0xff]
        %v364 = vld [vmem:[%s316 + $0x60] sm:$0xff]
        %v365 = vld [vmem:[%s316 + $0x68] sm:$0xff]
        %v366 = vld [vmem:[%s316 + $0x70] sm:$0xff]
        %v367 = vld [vmem:[%s316 + $0x78] sm:$0xff]
        %v368 = vld [vmem:[%s316 + $0x80] sm:$0xff]
        %v369 = vld [vmem:[%s316 + $0x88] sm:$0xff]
        %v370 = vld [vmem:[%s316 + $0x90] sm:$0xff]
        %v371 = vld [vmem:[%s316 + $0x98] sm:$0xff]
        %v372 = vld [vmem:[%s316 + $0xa0] sm:$0xff]
        %v373 = vld [vmem:[%s316 + $0xa8] sm:$0xff]
        %v374 = vld [vmem:[%s316 + $0xb0] sm:$0xff]
        %v375 = vld [vmem:[%s316 + $0xb8] sm:$0xff]
        %v376 = vld [vmem:[%s316 + $0xc0] sm:$0xff]
        %v377 = vld [vmem:[%s316 + $0xc8] sm:$0xff]
        %v378 = vld [vmem:[%s316 + $0xd0] sm:$0xff]
        %v379 = vld [vmem:[%s316 + $0xd8] sm:$0xff]
        %v380 = vld [vmem:[%s316 + $0xe0] sm:$0xff]
        %v381 = vld [vmem:[%s316 + $0xe8] sm:$0xff]
        %v382 = vld [vmem:[%s316 + $0xf0] sm:$0xff]
        %v383 = vld [vmem:[%s316 + $0xf8] sm:$0xff]
        %v384 = vpack.c.bf16 %v354, %v352
        %v385 = vpack.c.bf16 %v355, %v353
        %v386 = vpack.c.bf16 %v358, %v356
        %v387 = vpack.c.bf16 %v359, %v357
        %v388 = vpack.c.bf16 %v362, %v360
        %v389 = vpack.c.bf16 %v363, %v361
        %v390 = vpack.c.bf16 %v366, %v364
        %v391 = vpack.c.bf16 %v367, %v365
        %v392 = vpack.c.bf16 %v370, %v368
        %v393 = vpack.c.bf16 %v371, %v369
        %v394 = vpack.c.bf16 %v374, %v372
        %v395 = vpack.c.bf16 %v375, %v373
        %v396 = vpack.c.bf16 %v378, %v376
        %v397 = vpack.c.bf16 %v379, %v377
        %v398 = vpack.c.bf16 %v382, %v380
        %v399 = vpack.c.bf16 %v383, %v381
        %v400 = vld [vmem:[%s1] sm:$0xf]
        %v401 = vld [vmem:[%s1 + $0x4] sm:$0xf]
        %v402 = vld [vmem:[%s1 + $0x8] sm:$0xf]
        %v403 = vld [vmem:[%s1 + $0xc] sm:$0xf]
        %v404 = vld [vmem:[%s4] sm:$0xff]
        %v405 = vld [vmem:[%s4 + $0x8] sm:$0xff]
        %v406 = vld [vmem:[%s4 + $0x10] sm:$0xff]
        %v407 = vld [vmem:[%s4 + $0x18] sm:$0xff]
        %409 = vset.pattern.permute.xlu0 0
        %410 = vperm.xlu0 %409, %v404
        %v411 = vpop.permute.xlu0 %410
        %414 = vset.pattern.permute.xlu0 0
        %415 = vperm.xlu0 %414, %v405
        %v416 = vpop.permute.xlu0 %415
        %419 = vset.pattern.permute.xlu0 0
        %420 = vperm.xlu0 %419, %v406
        %v421 = vpop.permute.xlu0 %420
        %424 = vset.pattern.permute.xlu0 0
        %425 = vperm.xlu0 %424, %v407
        %v426 = vpop.permute.xlu0 %425
        %v432 = vunpack.c.l.b16 %v400
        %v433 = vunpack.c.l.b16 %v401
        %v434 = vunpack.c.l.b16 %v402
        %v435 = vunpack.c.l.b16 %v403
        %v436 = vpack.c.b16 %v433, %v432
        %v437 = vpack.c.b16 %v435, %v434
        %440 = vmatprep.subr.bf16.mxu0 %v399
        %441 = vmatpush1.bf16.msra.mxu0 %v398
        %442 = vmatprep.subr.bf16.mxu0 %v397
        %443 = vmatpush1.bf16.msra.mxu0 %v396
        %444 = vmatprep.subr.bf16.mxu0 %v395
        %445 = vmatpush1.bf16.msra.mxu0 %v394
        %446 = vmatprep.subr.bf16.mxu0 %v393
        %447 = vmatpush1.bf16.msra.mxu0 %v392
        %448 = vmatprep.subr.bf16.mxu0 %v391
        %449 = vmatpush1.bf16.msra.mxu0 %v390
        %450 = vmatprep.subr.bf16.mxu0 %v389
        %451 = vmatpush1.bf16.msra.mxu0 %v388
        %452 = vmatprep.subr.bf16.mxu0 %v387
        %453 = vmatpush1.bf16.msra.mxu0 %v386
        %454 = vmatprep.subr.bf16.mxu0 %v385
        %455 = vmatpush1.bf16.msra.mxu0 %v384
        %456 = vmatprep.subr.bf16.mxu0 0
        %457 = vmatpush2.bf16.msra.mxu0 0
        %458 = vmatprep.subr.bf16.mxu0 0
        %459 = vmatpush2.bf16.msra.mxu0 0
        %460 = vmatprep.subr.bf16.mxu0 0
        %461 = vmatpush2.bf16.msra.mxu0 0
        %462 = vmatprep.subr.bf16.mxu0 0
        %463 = vmatpush2.bf16.msra.mxu0 0
        %464 = vmatprep.subr.bf16.mxu0 0
        %465 = vmatpush2.bf16.msra.mxu0 0
        %466 = vmatprep.subr.bf16.mxu0 0
        %467 = vmatpush2.bf16.msra.mxu0 0
        %468 = vmatprep.subr.bf16.mxu0 0
        %469 = vmatpush2.bf16.msra.mxu0 0
        %470 = vmatprep.subr.bf16.mxu0 0
        %471 = vmatpush2.bf16.msra.mxu0 0
        %472 = vmatprep.mubr.bf16.mxu0 0
        %473 = vmatmul.mubr.bf16.gmra.mxu0 %v436
        %v474 = vpop.f32.mrf.mxu0
        %v475 = vadd.f32 %v411, %v474
        %v476 = vpop.f32.mrf.mxu0
        %v477 = vadd.f32 %v411, %v476
        %v478 = vpop.f32.mrf.mxu0
        %v479 = vadd.f32 %v416, %v478
        %v480 = vpop.f32.mrf.mxu0
        %v481 = vadd.f32 %v416, %v480
        %482 = vmatprep.mubr.bf16.mxu0 0
        %483 = vmatmul.mubr.bf16.gmra.mxu0 %v437
        %v484 = vpop.f32.mrf.mxu0
        %v485 = vadd.f32 %v421, %v484
        %v486 = vpop.f32.mrf.mxu0
        %v487 = vadd.f32 %v421, %v486
        %v488 = vpop.f32.mrf.mxu0
        %v489 = vadd.f32 %v426, %v488
        %v490 = vpop.f32.mrf.mxu0
        %v491 = vadd.f32 %v426, %v490
        %492 = vdwg.mxu0
        %v493 = vmax.f32 %v475, 0.0
        %v494 = vmax.f32 %v477, 0.0
        %v495 = vmax.f32 %v479, 0.0
        %v496 = vmax.f32 %v481, 0.0
        %v497 = vmax.f32 %v485, 0.0
        %v498 = vmax.f32 %v487, 0.0
        %v499 = vmax.f32 %v489, 0.0
        %v500 = vmax.f32 %v491, 0.0
        %v501 = vld [vmem:[%s7] sm:$0x3]
        %v502 = vld [vmem:[%s8] sm:$0x3]
        %503 = vrot.lane.b32.xlu0 %v493, 17
        %v504 = vpop.permute.xlu0 %503
        %505 = vrot.lane.b32.xlu0 %v495, 17
        %v506 = vpop.permute.xlu0 %505
        %507 = vrot.lane.b32.xlu0 %v497, 17
        %v508 = vpop.permute.xlu0 %507
        %509 = vrot.lane.b32.xlu0 %v499, 17
        %v510 = vpop.permute.xlu0 %509
        %511 = vrot.lane.b32.xlu0 %v494, 17
        %v512 = vpop.permute.xlu0 %511
        %513 = vrot.lane.b32.xlu0 %v496, 17
        %v514 = vpop.permute.xlu0 %513
        %515 = vrot.lane.b32.xlu0 %v498, 17
        %v516 = vpop.permute.xlu0 %515
        %517 = vrot.lane.b32.xlu0 %v500, 17
        %v518 = vpop.permute.xlu0 %517
        %v519 = vlaneseq
        %v520 = vand.u32 %v519, 127
        %vm521 = vcmp.lt.s32.totalorder %v520, 17
        %v522 = vsel %vm521, %v504, %v512
        %v523 = vsel %vm521, %v506, %v514
        %v524 = vsel %vm521, %v508, %v516
        %v525 = vsel %vm521, %v510, %v518
        %v526 = vsel %vm521, %v512, %v504
        %v527 = vsel %vm521, %v514, %v506
        %v528 = vsel %vm521, %v516, %v508
        %v529 = vsel %vm521, %v518, %v510
        %vm530 = vcmp.ge.s32.totalorder %v501, 1
        %vm531 = vcmp.ge.s32.totalorder %v502, 1
        %vm532 = vmand %vm530, %vm531
        %v533 = vsel %vm532, 1, 0
        %v534 = vlaneseq
        %v535 = vshrl.u32 %v534, 7
        %v536 = vsub.s32 0, %v535
        %v537 = vrot.slane %v533, %v536
        %v538 = vlaneseq
        %v539 = vshrl.u32 %v538, 7
        %v540 = vsub.s32 1, %v539
        %v541 = vrot.slane %v533, %v540
        %vm542 = vcmp.eq.s32.totalorder %v537, 1
        %vm543 = vcmp.eq.s32.totalorder %v541, 1
        %v544 = vsel %vm542, %v526, 0.0
        %v545 = vsel %vm543, %v522, 0.0
        %v546 = vsel %vm542, %v527, 0.0
        %v547 = vsel %vm543, %v523, 0.0
        %v548 = vsel %vm542, %v528, 0.0
        %v549 = vsel %vm543, %v524, 0.0
        %v550 = vsel %vm542, %v529, 0.0
        %v551 = vsel %vm543, %v525, 0.0
        %v552 = vpack.c.bf16 %v546, %v544
        %v553 = vpack.c.bf16 %v547, %v545
        %v554 = vpack.c.bf16 %v550, %v548
        %v555 = vpack.c.bf16 %v551, %v549
        %556 = vrot.lane.b32.xlu0 %v493, 16
        %v557 = vpop.permute.xlu0 %556
        %558 = vrot.lane.b32.xlu0 %v495, 16
        %v559 = vpop.permute.xlu0 %558
        %560 = vrot.lane.b32.xlu0 %v497, 16
        %v561 = vpop.permute.xlu0 %560
        %562 = vrot.lane.b32.xlu0 %v499, 16
        %v563 = vpop.permute.xlu0 %562
        %564 = vrot.lane.b32.xlu0 %v494, 16
        %v565 = vpop.permute.xlu0 %564
        %566 = vrot.lane.b32.xlu0 %v496, 16
        %v567 = vpop.permute.xlu0 %566
        %568 = vrot.lane.b32.xlu0 %v498, 16
        %v569 = vpop.permute.xlu0 %568
        %570 = vrot.lane.b32.xlu0 %v500, 16
        %v571 = vpop.permute.xlu0 %570
        %vm572 = vcmp.lt.s32.totalorder %v520, 16
        %v573 = vsel %vm572, %v557, %v565
        %v574 = vsel %vm572, %v559, %v567
        %v575 = vsel %vm572, %v561, %v569
        %v576 = vsel %vm572, %v563, %v571
        %v577 = vsel %vm572, %v565, %v557
        %v578 = vsel %vm572, %v567, %v559
        %v579 = vsel %vm572, %v569, %v561
        %v580 = vsel %vm572, %v571, %v563
        %v581 = vsel %vm530, 1, 0
        %v582 = vlaneseq
        %v583 = vshrl.u32 %v582, 7
        %v584 = vsub.s32 0, %v583
        %v585 = vrot.slane %v581, %v584
        %v586 = vlaneseq
        %v587 = vshrl.u32 %v586, 7
        %v588 = vsub.s32 1, %v587
        %v589 = vrot.slane %v581, %v588
        %vm590 = vcmp.eq.s32.totalorder %v585, 1
        %vm591 = vcmp.eq.s32.totalorder %v589, 1
        %v592 = vsel %vm590, %v577, 0.0
        %v593 = vsel %vm591, %v573, 0.0
        %v594 = vsel %vm590, %v578, 0.0
        %v595 = vsel %vm591, %v574, 0.0
        %v596 = vsel %vm590, %v579, 0.0
        %v597 = vsel %vm591, %v575, 0.0
        %v598 = vsel %vm590, %v580, 0.0
        %v599 = vsel %vm591, %v576, 0.0
        %v600 = vpack.c.bf16 %v594, %v592
        %v601 = vpack.c.bf16 %v595, %v593
        %v602 = vpack.c.bf16 %v598, %v596
        %v603 = vpack.c.bf16 %v599, %v597
        %604 = vrot.lane.b32.xlu0 %v493, 15
        %v605 = vpop.permute.xlu0 %604
        %606 = vrot.lane.b32.xlu0 %v495, 15
        %v607 = vpop.permute.xlu0 %606
        %608 = vrot.lane.b32.xlu0 %v497, 15
        %v609 = vpop.permute.xlu0 %608
        %610 = vrot.lane.b32.xlu0 %v499, 15
        %v611 = vpop.permute.xlu0 %610
        %612 = vrot.lane.b32.xlu0 %v494, 15
        %v613 = vpop.permute.xlu0 %612
        %614 = vrot.lane.b32.xlu0 %v496, 15
        %v615 = vpop.permute.xlu0 %614
        %616 = vrot.lane.b32.xlu0 %v498, 15
        %v617 = vpop.permute.xlu0 %616
        %618 = vrot.lane.b32.xlu0 %v500, 15
        %v619 = vpop.permute.xlu0 %618
        %vm620 = vcmp.lt.s32.totalorder %v520, 15
        %v621 = vsel %vm620, %v605, %v613
        %v622 = vsel %vm620, %v607, %v615
        %v623 = vsel %vm620, %v609, %v617
        %v624 = vsel %vm620, %v611, %v619
        %v625 = vsel %vm620, %v613, %v605
        %v626 = vsel %vm620, %v615, %v607
        %v627 = vsel %vm620, %v617, %v609
        %v628 = vsel %vm620, %v619, %v611
        %vm629 = vcmp.lt.s32.totalorder %v502, 15
        %vm630 = vmand %vm530, %vm629
        %v631 = vsel %vm630, 1, 0
        %v632 = vlaneseq
        %v633 = vshrl.u32 %v632, 7
        %v634 = vsub.s32 0, %v633
        %v635 = vrot.slane %v631, %v634
        %v636 = vlaneseq
        %v637 = vshrl.u32 %v636, 7
        %v638 = vsub.s32 1, %v637
        %v639 = vrot.slane %v631, %v638
        %vm640 = vcmp.eq.s32.totalorder %v635, 1
        %vm641 = vcmp.eq.s32.totalorder %v639, 1
        %v642 = vsel %vm640, %v625, 0.0
        %v643 = vsel %vm641, %v621, 0.0
        %v644 = vsel %vm640, %v626, 0.0
        %v645 = vsel %vm641, %v622, 0.0
        %v646 = vsel %vm640, %v627, 0.0
        %v647 = vsel %vm641, %v623, 0.0
        %v648 = vsel %vm640, %v628, 0.0
        %v649 = vsel %vm641, %v624, 0.0
        %v650 = vpack.c.bf16 %v644, %v642
        %v651 = vpack.c.bf16 %v645, %v643
        %v652 = vpack.c.bf16 %v648, %v646
        %v653 = vpack.c.bf16 %v649, %v647
        %654 = vrot.lane.b32.xlu0 %v493, 1
        %v655 = vpop.permute.xlu0 %654
        %656 = vrot.lane.b32.xlu0 %v495, 1
        %v657 = vpop.permute.xlu0 %656
        %658 = vrot.lane.b32.xlu0 %v497, 1
        %v659 = vpop.permute.xlu0 %658
        %660 = vrot.lane.b32.xlu0 %v499, 1
        %v661 = vpop.permute.xlu0 %660
        %662 = vrot.lane.b32.xlu0 %v494, 1
        %v663 = vpop.permute.xlu0 %662
        %664 = vrot.lane.b32.xlu0 %v496, 1
        %v665 = vpop.permute.xlu0 %664
        %666 = vrot.lane.b32.xlu0 %v498, 1
        %v667 = vpop.permute.xlu0 %666
        %668 = vrot.lane.b32.xlu0 %v500, 1
        %v669 = vpop.permute.xlu0 %668
        %vm670 = vcmp.lt.s32.totalorder %v520, 1
        %v671 = vsel %vm670, %v655, %v663
        %v672 = vsel %vm670, %v657, %v665
        %v673 = vsel %vm670, %v659, %v667
        %v674 = vsel %vm670, %v661, %v669
        %v675 = vsel %vm670, %v663, %v655
        %v676 = vsel %vm670, %v665, %v657
        %v677 = vsel %vm670, %v667, %v659
        %v678 = vsel %vm670, %v669, %v661
        %v679 = vsel %vm531, 1, 0
        %v680 = vlaneseq
        %v681 = vshrl.u32 %v680, 7
        %v682 = vsub.s32 0, %v681
        %v683 = vrot.slane %v679, %v682
        %v684 = vlaneseq
        %v685 = vshrl.u32 %v684, 7
        %v686 = vsub.s32 1, %v685
        %v687 = vrot.slane %v679, %v686
        %vm688 = vcmp.eq.s32.totalorder %v683, 1
        %vm689 = vcmp.eq.s32.totalorder %v687, 1
        %v690 = vsel %vm688, %v675, 0.0
        %v691 = vsel %vm689, %v671, 0.0
        %v692 = vsel %vm688, %v676, 0.0
        %v693 = vsel %vm689, %v672, 0.0
        %v694 = vsel %vm688, %v677, 0.0
        %v695 = vsel %vm689, %v673, 0.0
        %v696 = vsel %vm688, %v678, 0.0
        %v697 = vsel %vm689, %v674, 0.0
        %v698 = vpack.c.bf16 %v692, %v690
        %v699 = vpack.c.bf16 %v693, %v691
        %v700 = vpack.c.bf16 %v696, %v694
        %v701 = vpack.c.bf16 %v697, %v695
        %v702 = vpack.c.bf16 %v495, %v493
        %v703 = vpack.c.bf16 %v496, %v494
        %v704 = vpack.c.bf16 %v499, %v497
        %v705 = vpack.c.bf16 %v500, %v498
        %706 = vrot.lane.b32.xlu0 %v493, 127
        %v707 = vpop.permute.xlu0 %706
        %708 = vrot.lane.b32.xlu0 %v495, 127
        %v709 = vpop.permute.xlu0 %708
        %710 = vrot.lane.b32.xlu0 %v497, 127
        %v711 = vpop.permute.xlu0 %710
        %712 = vrot.lane.b32.xlu0 %v499, 127
        %v713 = vpop.permute.xlu0 %712
        %714 = vrot.lane.b32.xlu0 %v494, 127
        %v715 = vpop.permute.xlu0 %714
        %716 = vrot.lane.b32.xlu0 %v496, 127
        %v717 = vpop.permute.xlu0 %716
        %718 = vrot.lane.b32.xlu0 %v498, 127
        %v719 = vpop.permute.xlu0 %718
        %720 = vrot.lane.b32.xlu0 %v500, 127
        %v721 = vpop.permute.xlu0 %720
        %vm722 = vcmp.lt.s32.totalorder %v520, 127
        %v723 = vsel %vm722, %v707, %v715
        %v724 = vsel %vm722, %v709, %v717
        %v725 = vsel %vm722, %v711, %v719
        %v726 = vsel %vm722, %v713, %v721
        %v727 = vsel %vm722, %v715, %v707
        %v728 = vsel %vm722, %v717, %v709
        %v729 = vsel %vm722, %v719, %v711
        %v730 = vsel %vm722, %v721, %v713
        %v731 = vsel %vm629, 1, 0
        %v732 = vlaneseq
        %v733 = vshrl.u32 %v732, 7
        %v734 = vsub.s32 0, %v733
        %v735 = vrot.slane %v731, %v734
        %v736 = vlaneseq
        %v737 = vshrl.u32 %v736, 7
        %v738 = vsub.s32 1, %v737
        %v739 = vrot.slane %v731, %v738
        %vm740 = vcmp.eq.s32.totalorder %v735, 1
        %vm741 = vcmp.eq.s32.totalorder %v739, 1
        %v742 = vsel %vm740, %v723, 0.0
        %v743 = vsel %vm741, %v727, 0.0
        %v744 = vsel %vm740, %v724, 0.0
        %v745 = vsel %vm741, %v728, 0.0
        %v746 = vsel %vm740, %v725, 0.0
        %v747 = vsel %vm741, %v729, 0.0
        %v748 = vsel %vm740, %v726, 0.0
        %v749 = vsel %vm741, %v730, 0.0
        %v750 = vpack.c.bf16 %v744, %v742
        %v751 = vpack.c.bf16 %v745, %v743
        %v752 = vpack.c.bf16 %v748, %v746
        %v753 = vpack.c.bf16 %v749, %v747
        %754 = vrot.lane.b32.xlu0 %v493, 113
        %v755 = vpop.permute.xlu0 %754
        %756 = vrot.lane.b32.xlu0 %v495, 113
        %v757 = vpop.permute.xlu0 %756
        %758 = vrot.lane.b32.xlu0 %v497, 113
        %v759 = vpop.permute.xlu0 %758
        %760 = vrot.lane.b32.xlu0 %v499, 113
        %v761 = vpop.permute.xlu0 %760
        %762 = vrot.lane.b32.xlu0 %v494, 113
        %v763 = vpop.permute.xlu0 %762
        %764 = vrot.lane.b32.xlu0 %v496, 113
        %v765 = vpop.permute.xlu0 %764
        %766 = vrot.lane.b32.xlu0 %v498, 113
        %v767 = vpop.permute.xlu0 %766
        %768 = vrot.lane.b32.xlu0 %v500, 113
        %v769 = vpop.permute.xlu0 %768
        %vm770 = vcmp.lt.s32.totalorder %v520, 113
        %v771 = vsel %vm770, %v755, %v763
        %v772 = vsel %vm770, %v757, %v765
        %v773 = vsel %vm770, %v759, %v767
        %v774 = vsel %vm770, %v761, %v769
        %v775 = vsel %vm770, %v763, %v755
        %v776 = vsel %vm770, %v765, %v757
        %v777 = vsel %vm770, %v767, %v759
        %v778 = vsel %vm770, %v769, %v761
        %vm779 = vcmp.lt.s32.totalorder %v501, 15
        %vm780 = vmand %vm779, %vm531
        %v781 = vsel %vm780, 1, 0
        %v782 = vlaneseq
        %v783 = vshrl.u32 %v782, 7
        %v784 = vsub.s32 0, %v783
        %v785 = vrot.slane %v781, %v784
        %v786 = vlaneseq
        %v787 = vshrl.u32 %v786, 7
        %v788 = vsub.s32 1, %v787
        %v789 = vrot.slane %v781, %v788
        %vm790 = vcmp.eq.s32.totalorder %v785, 1
        %vm791 = vcmp.eq.s32.totalorder %v789, 1
        %v792 = vsel %vm790, %v771, 0.0
        %v793 = vsel %vm791, %v775, 0.0
        %v794 = vsel %vm790, %v772, 0.0
        %v795 = vsel %vm791, %v776, 0.0
        %v796 = vsel %vm790, %v773, 0.0
        %v797 = vsel %vm791, %v777, 0.0
        %v798 = vsel %vm790, %v774, 0.0
        %v799 = vsel %vm791, %v778, 0.0
        %v800 = vpack.c.bf16 %v794, %v792
        %v801 = vpack.c.bf16 %v795, %v793
        %v802 = vpack.c.bf16 %v798, %v796
        %v803 = vpack.c.bf16 %v799, %v797
        %804 = vrot.lane.b32.xlu0 %v493, 112
        %v805 = vpop.permute.xlu0 %804
        %806 = vrot.lane.b32.xlu0 %v495, 112
        %v807 = vpop.permute.xlu0 %806
        %808 = vrot.lane.b32.xlu0 %v497, 112
        %v809 = vpop.permute.xlu0 %808
        %810 = vrot.lane.b32.xlu0 %v499, 112
        %v811 = vpop.permute.xlu0 %810
        %812 = vrot.lane.b32.xlu0 %v494, 112
        %v813 = vpop.permute.xlu0 %812
        %814 = vrot.lane.b32.xlu0 %v496, 112
        %v815 = vpop.permute.xlu0 %814
        %816 = vrot.lane.b32.xlu0 %v498, 112
        %v817 = vpop.permute.xlu0 %816
        %818 = vrot.lane.b32.xlu0 %v500, 112
        %v819 = vpop.permute.xlu0 %818
        %vm820 = vcmp.lt.s32.totalorder %v520, 112
        %v821 = vsel %vm820, %v805, %v813
        %v822 = vsel %vm820, %v807, %v815
        %v823 = vsel %vm820, %v809, %v817
        %v824 = vsel %vm820, %v811, %v819
        %v825 = vsel %vm820, %v813, %v805
        %v826 = vsel %vm820, %v815, %v807
        %v827 = vsel %vm820, %v817, %v809
        %v828 = vsel %vm820, %v819, %v811
        %v829 = vsel %vm779, 1, 0
        %v830 = vlaneseq
        %v831 = vshrl.u32 %v830, 7
        %v832 = vsub.s32 0, %v831
        %v833 = vrot.slane %v829, %v832
        %v834 = vlaneseq
        %v835 = vshrl.u32 %v834, 7
        %v836 = vsub.s32 1, %v835
        %v837 = vrot.slane %v829, %v836
        %vm838 = vcmp.eq.s32.totalorder %v833, 1
        %vm839 = vcmp.eq.s32.totalorder %v837, 1
        %v840 = vsel %vm838, %v821, 0.0
        %v841 = vsel %vm839, %v825, 0.0
        %v842 = vsel %vm838, %v822, 0.0
        %v843 = vsel %vm839, %v826, 0.0
        %v844 = vsel %vm838, %v823, 0.0
        %v845 = vsel %vm839, %v827, 0.0
        %v846 = vsel %vm838, %v824, 0.0
        %v847 = vsel %vm839, %v828, 0.0
        %v848 = vpack.c.bf16 %v842, %v840
        %v849 = vpack.c.bf16 %v843, %v841
        %v850 = vpack.c.bf16 %v846, %v844
        %v851 = vpack.c.bf16 %v847, %v845
        %852 = vrot.lane.b32.xlu0 %v493, 111
        %v853 = vpop.permute.xlu0 %852
        %854 = vrot.lane.b32.xlu0 %v495, 111
        %v855 = vpop.permute.xlu0 %854
        %856 = vrot.lane.b32.xlu0 %v497, 111
        %v857 = vpop.permute.xlu0 %856
        %858 = vrot.lane.b32.xlu0 %v499, 111
        %v859 = vpop.permute.xlu0 %858
        %860 = vrot.lane.b32.xlu0 %v494, 111
        %v861 = vpop.permute.xlu0 %860
        %862 = vrot.lane.b32.xlu0 %v496, 111
        %v863 = vpop.permute.xlu0 %862
        %864 = vrot.lane.b32.xlu0 %v498, 111
        %v865 = vpop.permute.xlu0 %864
        %866 = vrot.lane.b32.xlu0 %v500, 111
        %v867 = vpop.permute.xlu0 %866
        %vm868 = vcmp.lt.s32.totalorder %v520, 111
        %v869 = vsel %vm868, %v853, %v861
        %v870 = vsel %vm868, %v855, %v863
        %v871 = vsel %vm868, %v857, %v865
        %v872 = vsel %vm868, %v859, %v867
        %v873 = vsel %vm868, %v861, %v853
        %v874 = vsel %vm868, %v863, %v855
        %v875 = vsel %vm868, %v865, %v857
        %v876 = vsel %vm868, %v867, %v859
        %vm877 = vmand %vm779, %vm629
        %v878 = vsel %vm877, 1, 0
        %v879 = vlaneseq
        %v880 = vshrl.u32 %v879, 7
        %v881 = vsub.s32 0, %v880
        %v882 = vrot.slane %v878, %v881
        %v883 = vlaneseq
        %v884 = vshrl.u32 %v883, 7
        %v885 = vsub.s32 1, %v884
        %v886 = vrot.slane %v878, %v885
        %vm887 = vcmp.eq.s32.totalorder %v882, 1
        %vm888 = vcmp.eq.s32.totalorder %v886, 1
        %v889 = vsel %vm887, %v869, 0.0
        %v890 = vsel %vm888, %v873, 0.0
        %v891 = vsel %vm887, %v870, 0.0
        %v892 = vsel %vm888, %v874, 0.0
        %v893 = vsel %vm887, %v871, 0.0
        %v894 = vsel %vm888, %v875, 0.0
        %v895 = vsel %vm887, %v872, 0.0
        %v896 = vsel %vm888, %v876, 0.0
        %v897 = vpack.c.bf16 %v891, %v889
        %v898 = vpack.c.bf16 %v892, %v890
        %v899 = vpack.c.bf16 %v895, %v893
        %v900 = vpack.c.bf16 %v896, %v894
        %v901 = vld [vmem:[%s2] sm:$0xff]
        %v902 = vld [vmem:[%s2 + $0x8] sm:$0xf]
        %v903 = vld [vmem:[%s2 + $0xc] sm:$0xff]
        %v904 = vld [vmem:[%s2 + $0x14] sm:$0xf]
        %v905 = vld [vmem:[%s2 + $0x18] sm:$0xff]
        %v906 = vld [vmem:[%s2 + $0x20] sm:$0xf]
        %v907 = vld [vmem:[%s2 + $0x24] sm:$0xff]
        %v908 = vld [vmem:[%s2 + $0x2c] sm:$0xf]
        %v909 = vld [vmem:[%s5] sm:$0xff]
        %v910 = vld [vmem:[%s5 + $0x8] sm:$0xff]
        %v911 = vld [vmem:[%s5 + $0x10] sm:$0xff]
        %v912 = vld [vmem:[%s5 + $0x18] sm:$0xff]
        %914 = vset.pattern.permute.xlu0 0
        %915 = vperm.xlu0 %914, %v909
        %v916 = vpop.permute.xlu0 %915
        %919 = vset.pattern.permute.xlu0 0
        %920 = vperm.xlu0 %919, %v910
        %v921 = vpop.permute.xlu0 %920
        %924 = vset.pattern.permute.xlu0 0
        %925 = vperm.xlu0 %924, %v911
        %v926 = vpop.permute.xlu0 %925
        %929 = vset.pattern.permute.xlu0 0
        %930 = vperm.xlu0 %929, %v912
        %v931 = vpop.permute.xlu0 %930
        %v941 = vunpack.c.l.b16 %v901
        %v942 = vunpack.c.h.b16 %v901
        %v943 = vunpack.c.l.b16 %v902
        %v944 = vunpack.c.l.b16 %v903
        %v945 = vunpack.c.h.b16 %v903
        %v946 = vunpack.c.l.b16 %v904
        %v947 = vunpack.c.l.b16 %v905
        %v948 = vunpack.c.h.b16 %v905
        %v949 = vunpack.c.l.b16 %v906
        %v950 = vunpack.c.l.b16 %v907
        %v951 = vunpack.c.h.b16 %v907
        %v952 = vunpack.c.l.b16 %v908
        %v953 = vpack.c.b16 %v944, %v941
        %v954 = vpack.c.b16 %v945, %v942
        %v955 = vpack.c.b16 %v946, %v943
        %v956 = vpack.c.b16 %v950, %v947
        %v957 = vpack.c.b16 %v951, %v948
        %v958 = vpack.c.b16 %v952, %v949
        %vm963 = vcmask 261120
        %v965 = vsel %vm963, %v955, 0
        %v968 = vsel %vm963, %v958, 0
        %970 = vmatprep.subr.bf16.mxu0 %v701
        %971 = vmatpush1.bf16.msra.mxu0 %v700
        %972 = vmatprep.subr.bf16.mxu0 %v699
        %973 = vmatpush1.bf16.msra.mxu0 %v698
        %974 = vmatprep.subr.bf16.mxu0 %v653
        %975 = vmatpush1.bf16.msra.mxu0 %v652
        %976 = vmatprep.subr.bf16.mxu0 %v651
        %977 = vmatpush1.bf16.msra.mxu0 %v650
        %978 = vmatprep.subr.bf16.mxu0 %v603
        %979 = vmatpush1.bf16.msra.mxu0 %v602
        %980 = vmatprep.subr.bf16.mxu0 %v601
        %981 = vmatpush1.bf16.msra.mxu0 %v600
        %982 = vmatprep.subr.bf16.mxu0 %v555
        %983 = vmatpush1.bf16.msra.mxu0 %v554
        %984 = vmatprep.subr.bf16.mxu0 %v553
        %985 = vmatpush1.bf16.msra.mxu0 %v552
        %986 = vmatprep.subr.bf16.mxu0 %v851
        %987 = vmatpush2.bf16.msra.mxu0 %v850
        %988 = vmatprep.subr.bf16.mxu0 %v849
        %989 = vmatpush2.bf16.msra.mxu0 %v848
        %990 = vmatprep.subr.bf16.mxu0 %v803
        %991 = vmatpush2.bf16.msra.mxu0 %v802
        %992 = vmatprep.subr.bf16.mxu0 %v801
        %993 = vmatpush2.bf16.msra.mxu0 %v800
        %994 = vmatprep.subr.bf16.mxu0 %v753
        %995 = vmatpush2.bf16.msra.mxu0 %v752
        %996 = vmatprep.subr.bf16.mxu0 %v751
        %997 = vmatpush2.bf16.msra.mxu0 %v750
        %998 = vmatprep.subr.bf16.mxu0 %v705
        %999 = vmatpush2.bf16.msra.mxu0 %v704
        %1000 = vmatprep.subr.bf16.mxu0 %v703
        %1001 = vmatpush2.bf16.msra.mxu0 %v702
        %1002 = vmatprep.mubr.bf16.mxu0 %v954
        %1003 = vmatmul.mubr.bf16.gmra.mxu0 %v953
        %v1004 = vpop.f32.mrf.mxu0
        %v1005 = vadd.f32 %v916, %v1004
        %v1006 = vpop.f32.mrf.mxu0
        %v1007 = vadd.f32 %v916, %v1006
        %v1008 = vpop.f32.mrf.mxu0
        %v1009 = vadd.f32 %v921, %v1008
        %v1010 = vpop.f32.mrf.mxu0
        %v1011 = vadd.f32 %v921, %v1010
        %1012 = vmatprep.mubr.bf16.mxu0 %v957
        %1013 = vmatmul.mubr.bf16.gmra.mxu0 %v956
        %v1014 = vpop.f32.mrf.mxu0
        %v1015 = vadd.f32 %v926, %v1014
        %v1016 = vpop.f32.mrf.mxu0
        %v1017 = vadd.f32 %v926, %v1016
        %v1018 = vpop.f32.mrf.mxu0
        %v1019 = vadd.f32 %v931, %v1018
        %v1020 = vpop.f32.mrf.mxu0
        %v1021 = vadd.f32 %v931, %v1020
        %1022 = vdwg.mxu0
        %1023 = vmatprep.subr.bf16.mxu0 0
        %1024 = vmatpush1.bf16.msra.mxu0 0
        %1025 = vmatprep.subr.bf16.mxu0 0
        %1026 = vmatpush1.bf16.msra.mxu0 0
        %1027 = vmatprep.subr.bf16.mxu0 0
        %1028 = vmatpush1.bf16.msra.mxu0 0
        %1029 = vmatprep.subr.bf16.mxu0 0
        %1030 = vmatpush1.bf16.msra.mxu0 0
        %1031 = vmatprep.subr.bf16.mxu0 0
        %1032 = vmatpush1.bf16.msra.mxu0 0
        %1033 = vmatprep.subr.bf16.mxu0 0
        %1034 = vmatpush1.bf16.msra.mxu0 0
        %1035 = vmatprep.subr.bf16.mxu0 %v900
        %1036 = vmatpush1.bf16.msra.mxu0 %v899
        %1037 = vmatprep.subr.bf16.mxu0 %v898
        %1038 = vmatpush1.bf16.msra.mxu0 %v897
        %1039 = vmatprep.subr.bf16.mxu0 0
        %1040 = vmatpush2.bf16.msra.mxu0 0
        %1041 = vmatprep.subr.bf16.mxu0 0
        %1042 = vmatpush2.bf16.msra.mxu0 0
        %1043 = vmatprep.subr.bf16.mxu0 0
        %1044 = vmatpush2.bf16.msra.mxu0 0
        %1045 = vmatprep.subr.bf16.mxu0 0
        %1046 = vmatpush2.bf16.msra.mxu0 0
        %1047 = vmatprep.subr.bf16.mxu0 0
        %1048 = vmatpush2.bf16.msra.mxu0 0
        %1049 = vmatprep.subr.bf16.mxu0 0
        %1050 = vmatpush2.bf16.msra.mxu0 0
        %1051 = vmatprep.subr.bf16.mxu0 0
        %1052 = vmatpush2.bf16.msra.mxu0 0
        %1053 = vmatprep.subr.bf16.mxu0 0
        %1054 = vmatpush2.bf16.msra.mxu0 0
        %1055 = vmatprep.mubr.bf16.mxu0 0
        %1056 = vmatmul.mubr.bf16.gmra.mxu0 %v965
        %v1057 = vpop.f32.mrf.mxu0
        %v1058 = vadd.f32 %v1005, %v1057
        %v1059 = vpop.f32.mrf.mxu0
        %v1060 = vadd.f32 %v1007, %v1059
        %v1061 = vpop.f32.mrf.mxu0
        %v1062 = vadd.f32 %v1009, %v1061
        %v1063 = vpop.f32.mrf.mxu0
        %v1064 = vadd.f32 %v1011, %v1063
        %1065 = vmatprep.mubr.bf16.mxu0 0
        %1066 = vmatmul.mubr.bf16.gmra.mxu0 %v968
        %v1067 = vpop.f32.mrf.mxu0
        %v1068 = vadd.f32 %v1015, %v1067
        %v1069 = vpop.f32.mrf.mxu0
        %v1070 = vadd.f32 %v1017, %v1069
        %v1071 = vpop.f32.mrf.mxu0
        %v1072 = vadd.f32 %v1019, %v1071
        %v1073 = vpop.f32.mrf.mxu0
        %v1074 = vadd.f32 %v1021, %v1073
        %1075 = vdwg.mxu0
        %v1076 = vmax.f32 %v1058, 0.0
        %v1077 = vmax.f32 %v1060, 0.0
        %v1078 = vmax.f32 %v1062, 0.0
        %v1079 = vmax.f32 %v1064, 0.0
        %v1080 = vmax.f32 %v1068, 0.0
        %v1081 = vmax.f32 %v1070, 0.0
        %v1082 = vmax.f32 %v1072, 0.0
        %v1083 = vmax.f32 %v1074, 0.0
        %v1084 = vld [vmem:[%s3] sm:$0xf]
        %v1085 = vld [vmem:[%s3 + $0x4] sm:$0xf]
        %v1086 = vld [vmem:[%s3 + $0x8] sm:$0xf]
        %v1087 = vld [vmem:[%s3 + $0xc] sm:$0xf]
        %v1088 = vld [vmem:[%s3 + $0x10] sm:$0xf]
        %v1089 = vld [vmem:[%s3 + $0x14] sm:$0xf]
        %v1090 = vld [vmem:[%s3 + $0x18] sm:$0xf]
        %v1091 = vld [vmem:[%s3 + $0x1c] sm:$0xf]
        %v1092 = vld [vmem:[%s3 + $0x20] sm:$0xf]
        %v1093 = vld [vmem:[%s3 + $0x24] sm:$0xf]
        %v1094 = vld [vmem:[%s3 + $0x28] sm:$0xf]
        %v1095 = vld [vmem:[%s3 + $0x2c] sm:$0xf]
        %v1096 = vld [vmem:[%s3 + $0x30] sm:$0xf]
        %v1097 = vld [vmem:[%s3 + $0x34] sm:$0xf]
        %v1098 = vld [vmem:[%s3 + $0x38] sm:$0xf]
        %v1099 = vld [vmem:[%s3 + $0x3c] sm:$0xf]
        %v1100 = vpack.c.bf16 %v1078, %v1076
        %v1101 = vpack.c.bf16 %v1079, %v1077
        %v1102 = vpack.c.bf16 %v1082, %v1080
        %v1103 = vpack.c.bf16 %v1083, %v1081
        %v1104 = vld [vmem:[%s6] sm:$0xff]
        %v1105 = vld [vmem:[%s6 + $0x8] sm:$0xff]
        %v1106 = vld [vmem:[%s6 + $0x10] sm:$0xff]
        %v1107 = vld [vmem:[%s6 + $0x18] sm:$0xff]
        %v1108 = vld [vmem:[%s6 + $0x20] sm:$0xff]
        %v1109 = vld [vmem:[%s6 + $0x28] sm:$0xff]
        %v1110 = vld [vmem:[%s6 + $0x30] sm:$0xff]
        %v1111 = vld [vmem:[%s6 + $0x38] sm:$0xff]
        %v1112 = vld [vmem:[%s6 + $0x40] sm:$0xff]
        %v1113 = vld [vmem:[%s6 + $0x48] sm:$0xff]
        %v1114 = vld [vmem:[%s6 + $0x50] sm:$0xff]
        %v1115 = vld [vmem:[%s6 + $0x58] sm:$0xff]
        %v1116 = vld [vmem:[%s6 + $0x60] sm:$0xff]
        %v1117 = vld [vmem:[%s6 + $0x68] sm:$0xff]
        %v1118 = vld [vmem:[%s6 + $0x70] sm:$0xff]
        %v1119 = vld [vmem:[%s6 + $0x78] sm:$0xff]
        %1121 = vset.pattern.permute.xlu0 0
        %1122 = vperm.xlu0 %1121, %v1104
        %v1123 = vpop.permute.xlu0 %1122
        %1126 = vset.pattern.permute.xlu0 0
        %1127 = vperm.xlu0 %1126, %v1105
        %v1128 = vpop.permute.xlu0 %1127
        %1131 = vset.pattern.permute.xlu0 0
        %1132 = vperm.xlu0 %1131, %v1106
        %v1133 = vpop.permute.xlu0 %1132
        %1136 = vset.pattern.permute.xlu0 0
        %1137 = vperm.xlu0 %1136, %v1107
        %v1138 = vpop.permute.xlu0 %1137
        %1141 = vset.pattern.permute.xlu0 0
        %1142 = vperm.xlu0 %1141, %v1108
        %v1143 = vpop.permute.xlu0 %1142
        %1146 = vset.pattern.permute.xlu0 0
        %1147 = vperm.xlu0 %1146, %v1109
        %v1148 = vpop.permute.xlu0 %1147
        %1151 = vset.pattern.permute.xlu0 0
        %1152 = vperm.xlu0 %1151, %v1110
        %v1153 = vpop.permute.xlu0 %1152
        %1156 = vset.pattern.permute.xlu0 0
        %1157 = vperm.xlu0 %1156, %v1111
        %v1158 = vpop.permute.xlu0 %1157
        %1161 = vset.pattern.permute.xlu0 0
        %1162 = vperm.xlu0 %1161, %v1112
        %v1163 = vpop.permute.xlu0 %1162
        %1166 = vset.pattern.permute.xlu0 0
        %1167 = vperm.xlu0 %1166, %v1113
        %v1168 = vpop.permute.xlu0 %1167
        %1171 = vset.pattern.permute.xlu0 0
        %1172 = vperm.xlu0 %1171, %v1114
        %v1173 = vpop.permute.xlu0 %1172
        %1176 = vset.pattern.permute.xlu0 0
        %1177 = vperm.xlu0 %1176, %v1115
        %v1178 = vpop.permute.xlu0 %1177
        %1181 = vset.pattern.permute.xlu0 0
        %1182 = vperm.xlu0 %1181, %v1116
        %v1183 = vpop.permute.xlu0 %1182
        %1186 = vset.pattern.permute.xlu0 0
        %1187 = vperm.xlu0 %1186, %v1117
        %v1188 = vpop.permute.xlu0 %1187
        %1191 = vset.pattern.permute.xlu0 0
        %1192 = vperm.xlu0 %1191, %v1118
        %v1193 = vpop.permute.xlu0 %1192
        %1196 = vset.pattern.permute.xlu0 0
        %1197 = vperm.xlu0 %1196, %v1119
        %v1198 = vpop.permute.xlu0 %1197
        %v1216 = vunpack.c.l.b16 %v1084
        %v1217 = vunpack.c.l.b16 %v1085
        %v1218 = vunpack.c.l.b16 %v1086
        %v1219 = vunpack.c.l.b16 %v1087
        %v1220 = vunpack.c.l.b16 %v1088
        %v1221 = vunpack.c.l.b16 %v1089
        %v1222 = vunpack.c.l.b16 %v1090
        %v1223 = vunpack.c.l.b16 %v1091
        %v1224 = vunpack.c.l.b16 %v1092
        %v1225 = vunpack.c.l.b16 %v1093
        %v1226 = vunpack.c.l.b16 %v1094
        %v1227 = vunpack.c.l.b16 %v1095
        %v1228 = vunpack.c.l.b16 %v1096
        %v1229 = vunpack.c.l.b16 %v1097
        %v1230 = vunpack.c.l.b16 %v1098
        %v1231 = vunpack.c.l.b16 %v1099
        %v1232 = vpack.c.b16 %v1217, %v1216
        %v1233 = vpack.c.b16 %v1219, %v1218
        %v1234 = vpack.c.b16 %v1221, %v1220
        %v1235 = vpack.c.b16 %v1223, %v1222
        %v1236 = vpack.c.b16 %v1225, %v1224
        %v1237 = vpack.c.b16 %v1227, %v1226
        %v1238 = vpack.c.b16 %v1229, %v1228
        %v1239 = vpack.c.b16 %v1231, %v1230
        %v1241 = vsel %vm963, %v1232, 0
        %v1244 = vsel %vm963, %v1233, 0
        %v1247 = vsel %vm963, %v1234, 0
        %v1250 = vsel %vm963, %v1235, 0
        %v1253 = vsel %vm963, %v1236, 0
        %v1256 = vsel %vm963, %v1237, 0
        %v1259 = vsel %vm963, %v1238, 0
        %v1262 = vsel %vm963, %v1239, 0
        %1264 = vmatprep.subr.bf16.mxu0 0
        %1265 = vmatpush1.bf16.msra.mxu0 0
        %1266 = vmatprep.subr.bf16.mxu0 0
        %1267 = vmatpush1.bf16.msra.mxu0 0
        %1268 = vmatprep.subr.bf16.mxu0 0
        %1269 = vmatpush1.bf16.msra.mxu0 0
        %1270 = vmatprep.subr.bf16.mxu0 0
        %1271 = vmatpush1.bf16.msra.mxu0 0
        %1272 = vmatprep.subr.bf16.mxu0 0
        %1273 = vmatpush1.bf16.msra.mxu0 0
        %1274 = vmatprep.subr.bf16.mxu0 0
        %1275 = vmatpush1.bf16.msra.mxu0 0
        %1276 = vmatprep.subr.bf16.mxu0 %v1103
        %1277 = vmatpush1.bf16.msra.mxu0 %v1102
        %1278 = vmatprep.subr.bf16.mxu0 %v1101
        %1279 = vmatpush1.bf16.msra.mxu0 %v1100
        %1280 = vmatprep.subr.bf16.mxu0 0
        %1281 = vmatpush2.bf16.msra.mxu0 0
        %1282 = vmatprep.subr.bf16.mxu0 0
        %1283 = vmatpush2.bf16.msra.mxu0 0
        %1284 = vmatprep.subr.bf16.mxu0 0
        %1285 = vmatpush2.bf16.msra.mxu0 0
        %1286 = vmatprep.subr.bf16.mxu0 0
        %1287 = vmatpush2.bf16.msra.mxu0 0
        %1288 = vmatprep.subr.bf16.mxu0 0
        %1289 = vmatpush2.bf16.msra.mxu0 0
        %1290 = vmatprep.subr.bf16.mxu0 0
        %1291 = vmatpush2.bf16.msra.mxu0 0
        %1292 = vmatprep.subr.bf16.mxu0 0
        %1293 = vmatpush2.bf16.msra.mxu0 0
        %1294 = vmatprep.subr.bf16.mxu0 0
        %1295 = vmatpush2.bf16.msra.mxu0 0
        %1296 = vmatprep.mubr.bf16.mxu0 0
        %1297 = vmatmul.mubr.bf16.gmra.mxu0 %v1241
        %v1298 = vpop.f32.mrf.mxu0
        %v1299 = vadd.f32 %v1123, %v1298
        %v1300 = vpop.f32.mrf.mxu0
        %v1301 = vadd.f32 %v1123, %v1300
        %v1302 = vpop.f32.mrf.mxu0
        %v1303 = vadd.f32 %v1128, %v1302
        %v1304 = vpop.f32.mrf.mxu0
        %v1305 = vadd.f32 %v1128, %v1304
        %1306 = vmatprep.mubr.bf16.mxu0 0
        %1307 = vmatmul.mubr.bf16.gmra.mxu0 %v1244
        %v1308 = vpop.f32.mrf.mxu0
        %v1309 = vadd.f32 %v1133, %v1308
        %v1310 = vpop.f32.mrf.mxu0
        %v1311 = vadd.f32 %v1133, %v1310
        %v1312 = vpop.f32.mrf.mxu0
        %v1313 = vadd.f32 %v1138, %v1312
        %v1314 = vpop.f32.mrf.mxu0
        %v1315 = vadd.f32 %v1138, %v1314
        %1316 = vmatprep.mubr.bf16.mxu0 0
        %1317 = vmatmul.mubr.bf16.gmra.mxu0 %v1247
        %v1318 = vpop.f32.mrf.mxu0
        %v1319 = vadd.f32 %v1143, %v1318
        %v1320 = vpop.f32.mrf.mxu0
        %v1321 = vadd.f32 %v1143, %v1320
        %v1322 = vpop.f32.mrf.mxu0
        %v1323 = vadd.f32 %v1148, %v1322
        %v1324 = vpop.f32.mrf.mxu0
        %v1325 = vadd.f32 %v1148, %v1324
        %1326 = vmatprep.mubr.bf16.mxu0 0
        %1327 = vmatmul.mubr.bf16.gmra.mxu0 %v1250
        %v1328 = vpop.f32.mrf.mxu0
        %v1329 = vadd.f32 %v1153, %v1328
        %v1330 = vpop.f32.mrf.mxu0
        %v1331 = vadd.f32 %v1153, %v1330
        %v1332 = vpop.f32.mrf.mxu0
        %v1333 = vadd.f32 %v1158, %v1332
        %v1334 = vpop.f32.mrf.mxu0
        %v1335 = vadd.f32 %v1158, %v1334
        %1336 = vmatprep.mubr.bf16.mxu0 0
        %1337 = vmatmul.mubr.bf16.gmra.mxu0 %v1253
        %v1338 = vpop.f32.mrf.mxu0
        %v1339 = vadd.f32 %v1163, %v1338
        %v1340 = vpop.f32.mrf.mxu0
        %v1341 = vadd.f32 %v1163, %v1340
        %v1342 = vpop.f32.mrf.mxu0
        %v1343 = vadd.f32 %v1168, %v1342
        %v1344 = vpop.f32.mrf.mxu0
        %v1345 = vadd.f32 %v1168, %v1344
        %1346 = vmatprep.mubr.bf16.mxu0 0
        %1347 = vmatmul.mubr.bf16.gmra.mxu0 %v1256
        %v1348 = vpop.f32.mrf.mxu0
        %v1349 = vadd.f32 %v1173, %v1348
        %v1350 = vpop.f32.mrf.mxu0
        %v1351 = vadd.f32 %v1173, %v1350
        %v1352 = vpop.f32.mrf.mxu0
        %v1353 = vadd.f32 %v1178, %v1352
        %v1354 = vpop.f32.mrf.mxu0
        %v1355 = vadd.f32 %v1178, %v1354
        %1356 = vmatprep.mubr.bf16.mxu0 0
        %1357 = vmatmul.mubr.bf16.gmra.mxu0 %v1259
        %v1358 = vpop.f32.mrf.mxu0
        %v1359 = vadd.f32 %v1183, %v1358
        %v1360 = vpop.f32.mrf.mxu0
        %v1361 = vadd.f32 %v1183, %v1360
        %v1362 = vpop.f32.mrf.mxu0
        %v1363 = vadd.f32 %v1188, %v1362
        %v1364 = vpop.f32.mrf.mxu0
        %v1365 = vadd.f32 %v1188, %v1364
        %1366 = vmatprep.mubr.bf16.mxu0 0
        %1367 = vmatmul.mubr.bf16.gmra.mxu0 %v1262
        %v1368 = vpop.f32.mrf.mxu0
        %v1369 = vadd.f32 %v1193, %v1368
        %v1370 = vpop.f32.mrf.mxu0
        %v1371 = vadd.f32 %v1193, %v1370
        %v1372 = vpop.f32.mrf.mxu0
        %v1373 = vadd.f32 %v1198, %v1372
        %v1374 = vpop.f32.mrf.mxu0
        %v1375 = vadd.f32 %v1198, %v1374
        %1376 = vdwg.mxu0
        %v1377 = vadd.f32 %v1299, %v352
        %v1378 = vadd.f32 %v1301, %v353
        %v1379 = vadd.f32 %v1303, %v354
        %v1380 = vadd.f32 %v1305, %v355
        %v1381 = vadd.f32 %v1309, %v356
        %v1382 = vadd.f32 %v1311, %v357
        %v1383 = vadd.f32 %v1313, %v358
        %v1384 = vadd.f32 %v1315, %v359
        %v1385 = vadd.f32 %v1319, %v360
        %v1386 = vadd.f32 %v1321, %v361
        %v1387 = vadd.f32 %v1323, %v362
        %v1388 = vadd.f32 %v1325, %v363
        %v1389 = vadd.f32 %v1329, %v364
        %v1390 = vadd.f32 %v1331, %v365
        %v1391 = vadd.f32 %v1333, %v366
        %v1392 = vadd.f32 %v1335, %v367
        %v1393 = vadd.f32 %v1339, %v368
        %v1394 = vadd.f32 %v1341, %v369
        %v1395 = vadd.f32 %v1343, %v370
        %v1396 = vadd.f32 %v1345, %v371
        %v1397 = vadd.f32 %v1349, %v372
        %v1398 = vadd.f32 %v1351, %v373
        %v1399 = vadd.f32 %v1353, %v374
        %v1400 = vadd.f32 %v1355, %v375
        %v1401 = vadd.f32 %v1359, %v376
        %v1402 = vadd.f32 %v1361, %v377
        %v1403 = vadd.f32 %v1363, %v378
        %v1404 = vadd.f32 %v1365, %v379
        %v1405 = vadd.f32 %v1369, %v380
        %v1406 = vadd.f32 %v1371, %v381
        %v1407 = vadd.f32 %v1373, %v382
        %v1408 = vadd.f32 %v1375, %v383
        %v1409 = vmax.f32 %v1377, 0.0
        %v1410 = vmax.f32 %v1378, 0.0
        %v1411 = vmax.f32 %v1379, 0.0
        %v1412 = vmax.f32 %v1380, 0.0
        %v1413 = vmax.f32 %v1381, 0.0
        %v1414 = vmax.f32 %v1382, 0.0
        %v1415 = vmax.f32 %v1383, 0.0
        %v1416 = vmax.f32 %v1384, 0.0
        %v1417 = vmax.f32 %v1385, 0.0
        %v1418 = vmax.f32 %v1386, 0.0
        %v1419 = vmax.f32 %v1387, 0.0
        %v1420 = vmax.f32 %v1388, 0.0
        %v1421 = vmax.f32 %v1389, 0.0
        %v1422 = vmax.f32 %v1390, 0.0
        %v1423 = vmax.f32 %v1391, 0.0
        %v1424 = vmax.f32 %v1392, 0.0
        %v1425 = vmax.f32 %v1393, 0.0
        %v1426 = vmax.f32 %v1394, 0.0
        %v1427 = vmax.f32 %v1395, 0.0
        %v1428 = vmax.f32 %v1396, 0.0
        %v1429 = vmax.f32 %v1397, 0.0
        %v1430 = vmax.f32 %v1398, 0.0
        %v1431 = vmax.f32 %v1399, 0.0
        %v1432 = vmax.f32 %v1400, 0.0
        %v1433 = vmax.f32 %v1401, 0.0
        %v1434 = vmax.f32 %v1402, 0.0
        %v1435 = vmax.f32 %v1403, 0.0
        %v1436 = vmax.f32 %v1404, 0.0
        %v1437 = vmax.f32 %v1405, 0.0
        %v1438 = vmax.f32 %v1406, 0.0
        %v1439 = vmax.f32 %v1407, 0.0
        %v1440 = vmax.f32 %v1408, 0.0
        %1441 = vst [vmem:[%s350] sm:$0xff] %v1409
        %1442 = vst [vmem:[%s350 + $0x8] sm:$0xff] %v1410
        %1443 = vst [vmem:[%s350 + $0x10] sm:$0xff] %v1411
        %1444 = vst [vmem:[%s350 + $0x18] sm:$0xff] %v1412
        %1445 = vst [vmem:[%s350 + $0x20] sm:$0xff] %v1413
        %1446 = vst [vmem:[%s350 + $0x28] sm:$0xff] %v1414
        %1447 = vst [vmem:[%s350 + $0x30] sm:$0xff] %v1415
        %1448 = vst [vmem:[%s350 + $0x38] sm:$0xff] %v1416
        %1449 = vst [vmem:[%s350 + $0x40] sm:$0xff] %v1417
        %1450 = vst [vmem:[%s350 + $0x48] sm:$0xff] %v1418
        %1451 = vst [vmem:[%s350 + $0x50] sm:$0xff] %v1419
        %1452 = vst [vmem:[%s350 + $0x58] sm:$0xff] %v1420
        %1453 = vst [vmem:[%s350 + $0x60] sm:$0xff] %v1421
        %1454 = vst [vmem:[%s350 + $0x68] sm:$0xff] %v1422
        %1455 = vst [vmem:[%s350 + $0x70] sm:$0xff] %v1423
        %1456 = vst [vmem:[%s350 + $0x78] sm:$0xff] %v1424
        %1457 = vst [vmem:[%s350 + $0x80] sm:$0xff] %v1425
        %1458 = vst [vmem:[%s350 + $0x88] sm:$0xff] %v1426
        %1459 = vst [vmem:[%s350 + $0x90] sm:$0xff] %v1427
        %1460 = vst [vmem:[%s350 + $0x98] sm:$0xff] %v1428
        %1461 = vst [vmem:[%s350 + $0xa0] sm:$0xff] %v1429
        %1462 = vst [vmem:[%s350 + $0xa8] sm:$0xff] %v1430
        %1463 = vst [vmem:[%s350 + $0xb0] sm:$0xff] %v1431
        %1464 = vst [vmem:[%s350 + $0xb8] sm:$0xff] %v1432
        %1465 = vst [vmem:[%s350 + $0xc0] sm:$0xff] %v1433
        %1466 = vst [vmem:[%s350 + $0xc8] sm:$0xff] %v1434
        %1467 = vst [vmem:[%s350 + $0xd0] sm:$0xff] %v1435
        %1468 = vst [vmem:[%s350 + $0xd8] sm:$0xff] %v1436
        %1469 = vst [vmem:[%s350 + $0xe0] sm:$0xff] %v1437
        %1470 = vst [vmem:[%s350 + $0xe8] sm:$0xff] %v1438
        %1471 = vst [vmem:[%s350 + $0xf0] sm:$0xff] %v1439
        %1472 = vst [vmem:[%s350 + $0xf8] sm:$0xff] %v1440
        %s1473 = sand.u32 %s228, 1
        %s1474 = scalar_lea.sflag [#allocation4], %s1473
        %s1475 = sand.u32 %s228, 1
        %s1476 = smul.addr %s1475, 256
        %s1477 = scalar_lea.vmem [#allocation5], %s1476
        // Predicated region
        $region61: #{tpu_custom_call.1} parent=55 // pred_check
          %p1478 = pneg %p238
        $region62: #{tpu_custom_call.1} parent=55 // pred_check_branch
          %1480 = sbr.rel (%p1478) target = $region64
        $region63: #{tpu_custom_call.1} parent=55 // pred_region
          %s1482 = ssub.s32 4096, 4096
          %1483 = vsyncadd %s1474, %s1482
          %s1484 = smul.addr %s26, 32
          %s1485 = smul.addr %s1484, 128
          %s1486 = scalar_lea.hbm %s9, %s1485
          %s1487 = sshll.u32 %s1477, 4
          %s1488 = int_to_ptr.vmem [resolvable:$true] %s1487
          %1493 = dma.vmem_to_hbm [thread:$0]  %s1488, 4096, %s1486, %s1474, 256, 256, 16
        $region64: #{tpu_custom_call.1} parent=55 // pred_fallthru
          _
      $region56: #{tpu_custom_call.1} parent=5 // pred_fallthru
        _
      %p1494 = scmp.le.s32.totalorder 2, %s21
      // Predicated region
      $region65: #{tpu_custom_call.1} parent=5 // pred_check
        %p1495 = pneg %p1494
      $region66: #{tpu_custom_call.1} parent=5 // pred_check_branch
        %1497 = sbr.rel (%p1495) target = $region68
      $region67: #{tpu_custom_call.1} parent=5 // pred_region
        %s1498 = ssub.s32 %s21, 2
        // Predicated region
        $region69: #{tpu_custom_call.1} parent=67 // pred_check
          %p1499 = pneg %p244
        $region70: #{tpu_custom_call.1} parent=67 // pred_check_branch
          %1501 = sbr.rel (%p1499) target = $region72
        $region71: #{tpu_custom_call.1} parent=67 // pred_region
          %s1502 = sand.u32 %s229, 1
          %s1503 = scalar_lea.sflag [#allocation4], %s1502
          %s1504 = sand.u32 %s229, 1
          %s1505 = smul.addr %s1504, 256
          %s1506 = scalar_lea.vmem [#allocation5], %s1505
          %1507 = dma.done %s1503, 4096
        $region72: #{tpu_custom_call.1} parent=67 // pred_fallthru
          _
      $region68: #{tpu_custom_call.1} parent=5 // pred_fallthru
        _
    $region6: #{tpu_custom_call.1} parent=1 // loop_footer
      %s25 = sadd.s32 1, %s21
    $region7: #{tpu_custom_call.1} parent=1 // loop_footer_branch
      %20 = sbr.rel target = $region3
    $region8: #{tpu_custom_call.1} parent=1 // loop_exit
      _
    %1508 = vsyncpa [#allocation3], 1
    %s1509 = scalar_lea.sflag [#allocation3], 1
    %1510 = vsyncpa %s1509, 1
    %1511 = vsyncpa [#allocation4], 1
    %s1512 = scalar_lea.sflag [#allocation4], 1
    %1513 = vsyncpa %s1512, 1

</llo_original>
